<compile_context>
chip_gen: v5e
topology: v5e:2x2
jax: 0.10.0
libtpu: 0.0.40
codegen_flags: <defaults>
</compile_context>

<pallas_src>
import functools

import jax
import jax.numpy as jnp
from jax.experimental import pallas as pl
from jax.experimental.pallas import tpu as pltpu


def _round_up(x, m):
    return (x + m - 1) // m * m


# ----------------------------------------------------------------------------
# Pallas kernel: fused matmul + bias + (optional) SiLU
# ----------------------------------------------------------------------------
def _matmul_bias_act_kernel(x_ref, w_ref, b_ref, o_ref, *, act):
    # bf16 x bf16 -> f32 accumulation on the MXU.
    acc = jnp.dot(x_ref[...], w_ref[...], preferred_element_type=jnp.float32)
    acc = acc + b_ref[...]  # (1, N) f32 bias, broadcast over tile rows
    if act == "silu":
        # Post-matmul elementwise stays f32 (v5e has no bf16 VPU/EUP path).
        acc = acc * jax.nn.sigmoid(acc)
    o_ref[...] = acc.astype(o_ref.dtype)


def pallas_matmul_bias_act(x, w, b, act="none", out_dtype=jnp.float32):
    """x: [M, K], w: [K, N], b: [N]  ->  [M, N] (fused bias + activation).

    M is tiled with a "parallel" grid axis; N is padded to a multiple of 128 for
    lane-dense output stores (stripped before returning); MXU inputs are bf16.
    """
    M, K = x.shape
    K2, N = w.shape
    assert K == K2

    N_pad = _round_up(N, 128)
    TILE_M = 512 if M >= 512 else _round_up(M, 8)
    M_pad = _round_up(M, TILE_M)

    xb = x.astype(jnp.bfloat16)
    if M_pad != M:
        xb = jnp.pad(xb, ((0, M_pad - M), (0, 0)))
    wb = w.astype(jnp.bfloat16)
    bf = b.astype(jnp.float32)
    if N_pad != N:
        wb = jnp.pad(wb, ((0, 0), (0, N_pad - N)))
        bf = jnp.pad(bf, (0, N_pad - N))
    b2 = bf.reshape(1, N_pad)

    out_itemsize = jnp.dtype(out_dtype).itemsize
    # Double-buffered tile footprint; keep well under v7x's 64 MiB physical VMEM.
    tile_bytes = 2 * (TILE_M * K * 2 + K * N_pad * 2 + N_pad * 4
                      + TILE_M * N_pad * out_itemsize)
    vmem_limit = int(min(max(2 * tile_bytes, 4 * 1024 * 1024), 64 * 1024 * 1024))

    kernel = functools.partial(_matmul_bias_act_kernel, act=act)
    grid = (M_pad // TILE_M,)

    out = pl.pallas_call(
        kernel,
        out_shape=jax.ShapeDtypeStruct((M_pad, N_pad), out_dtype),
        grid=grid,
        in_specs=[
            pl.BlockSpec((TILE_M, K), lambda i: (i, 0)),   # activation tiles stream
            pl.BlockSpec((K, N_pad), lambda i: (0, 0)),    # weight stays resident
            pl.BlockSpec((1, N_pad), lambda i: (0, 0)),    # bias stays resident
        ],
        out_specs=pl.BlockSpec((TILE_M, N_pad), lambda i: (i, 0)),
        compiler_params=pltpu.CompilerParams(
            dimension_semantics=("parallel",),             # megacore on v7x
            vmem_limit_bytes=vmem_limit,
        ),
        cost_estimate=pl.CostEstimate(
            flops=2 * M_pad * K * N_pad,
            transcendentals=M_pad * N_pad if act == "silu" else 0,
            bytes_accessed=xb.size * 2 + wb.size * 2 + b2.size * 4
                           + M_pad * N_pad * out_itemsize,
        ),
    )(xb, wb, b2)
    return out[:M, :N]


# ----------------------------------------------------------------------------
# Conv2d (NHWC) = im2col glue + Pallas fused matmul kernel
# ----------------------------------------------------------------------------
def _im2col_nhwc(x, kh, kw, stride, padding):
    B, H, W, C = x.shape
    if kh == 1 and kw == 1 and padding == 0 and stride == 1:
        # 1x1 conv: pure channel mixing, no patch extraction needed.
        return x.reshape(B * H * W, C), H, W
    x_pad = jnp.pad(x, ((0, 0), (padding, padding), (padding, padding), (0, 0)))
    Ho = (H + 2 * padding - kh) // stride + 1
    Wo = (W + 2 * padding - kw) // stride + 1
    patches = []
    for i in range(kh):
        for j in range(kw):
            patches.append(
                x_pad[:, i:i + stride * Ho:stride, j:j + stride * Wo:stride, :]
            )
    cols = jnp.concatenate(patches, axis=-1)  # [B, Ho, Wo, kh*kw*C]
    return cols.reshape(B * Ho * Wo, kh * kw * C), Ho, Wo


def conv2d_nhwc(x, w, b, stride=1, padding=1, act="silu", out_dtype=jnp.bfloat16):
    """PyTorch-style cross-correlation conv in NHWC.
    x: [B, H, W, Cin]; w: [kh, kw, Cin, Cout]; b: [Cout]."""
    B, H, W, C = x.shape
    kh, kw, cin, cout = w.shape
    assert cin == C
    cols, Ho, Wo = _im2col_nhwc(x, kh, kw, stride, padding)
    wmat = w.reshape(kh * kw * cin, cout)
    out = pallas_matmul_bias_act(cols, wmat, b, act=act, out_dtype=out_dtype)
    return out.reshape(B, Ho, Wo, cout)


def upsample2x_nearest_nhwc(x):
    x = jnp.repeat(x, 2, axis=1)
    return jnp.repeat(x, 2, axis=2)


# ----------------------------------------------------------------------------
# Deterministic parameter init (HWIO weight layout)
# ----------------------------------------------------------------------------
def _conv_params(key, kh, kw, cin, cout):
    kw_, kb_ = jax.random.split(key)
    fan_in = kh * kw * cin
    w = 0.1 * jax.random.normal(kw_, (kh, kw, cin, cout), dtype=jnp.float32) / jnp.sqrt(fan_in)
    b = 0.01 * jax.random.normal(kb_, (cout,), dtype=jnp.float32)
    return {"w": w, "b": b}


def init_yolox_params(key, in_ch=4, widths=(8, 16, 32), neck_ch=16, num_classes=4):
    keys = jax.random.split(key, 16)
    c1, c2, c3 = widths
    p = {
        # backbone
        "stem": _conv_params(keys[0], 3, 3, in_ch, c1),
        "stage2": _conv_params(keys[1], 3, 3, c1, c2),
        "stage3": _conv_params(keys[2], 3, 3, c2, c3),
        # neck laterals (1x1) + smooth (3x3)
        "lat1": _conv_params(keys[3], 1, 1, c1, neck_ch),
        "lat2": _conv_params(keys[4], 1, 1, c2, neck_ch),
        "lat3": _conv_params(keys[5], 1, 1, c3, neck_ch),
        "smooth1": _conv_params(keys[6], 3, 3, neck_ch, neck_ch),
        "smooth2": _conv_params(keys[7], 3, 3, neck_ch, neck_ch),
        "smooth3": _conv_params(keys[8], 3, 3, neck_ch, neck_ch),
        # head (per scale)
        "cls": [_conv_params(keys[9 + i], 1, 1, neck_ch, num_classes) for i in range(3)],
        "reg": [_conv_params(keys[12 + i], 1, 1, neck_ch, 4) for i in range(3)],
    }
    p["obj"] = [_conv_params(jax.random.fold_in(keys[12 + i], 7), 1, 1, neck_ch, 1)
                for i in range(3)]
    return p


# ----------------------------------------------------------------------------
# YOLOX forward: backbone -> neck -> head (all NHWC internally)
# ----------------------------------------------------------------------------
def backbone_fwd(p, x):
    f1 = conv2d_nhwc(x, p["stem"]["w"], p["stem"]["b"], stride=1, padding=1, act="silu")
    f2 = conv2d_nhwc(f1, p["stage2"]["w"], p["stage2"]["b"], stride=2, padding=1, act="silu")
    f3 = conv2d_nhwc(f2, p["stage3"]["w"], p["stage3"]["b"], stride=2, padding=1, act="silu")
    return (f1, f2, f3)


def neck_fwd(p, feats):
    f1, f2, f3 = feats
    l1 = conv2d_nhwc(f1, p["lat1"]["w"], p["lat1"]["b"], stride=1, padding=0, act="none")
    l2 = conv2d_nhwc(f2, p["lat2"]["w"], p["lat2"]["b"], stride=1, padding=0, act="none")
    l3 = conv2d_nhwc(f3, p["lat3"]["w"], p["lat3"]["b"], stride=1, padding=0, act="none")
    t3 = l3
    t2 = l2 + upsample2x_nearest_nhwc(t3)
    t1 = l1 + upsample2x_nearest_nhwc(t2)
    p1 = conv2d_nhwc(t1, p["smooth1"]["w"], p["smooth1"]["b"], stride=1, padding=1, act="silu")
    p2 = conv2d_nhwc(t2, p["smooth2"]["w"], p["smooth2"]["b"], stride=1, padding=1, act="silu")
    p3 = conv2d_nhwc(t3, p["smooth3"]["w"], p["smooth3"]["b"], stride=1, padding=1, act="silu")
    return (p1, p2, p3)


def head_fwd(p, feats):
    outs = []
    for i, f in enumerate(feats):
        # Fuse reg(4) / obj(1) / cls(num_classes) 1x1 convs into a single matmul:
        # one pallas_call per scale, one HBM read of the feature map, lane-dense output.
        w = jnp.concatenate([p["reg"][i]["w"], p["obj"][i]["w"], p["cls"][i]["w"]], axis=-1)
        b = jnp.concatenate([p["reg"][i]["b"], p["obj"][i]["b"], p["cls"][i]["b"]], axis=-1)
        o = conv2d_nhwc(f, w, b, stride=1, padding=0, act="none", out_dtype=jnp.float32)
        # [N, num_classes + 4 + 1, H, W]  (channel order: reg, obj, cls)
        outs.append(jnp.transpose(o, (0, 3, 1, 2)))
    return outs


def yolox_forward(params, inputs, targets=None):
    x = jnp.transpose(inputs, (0, 2, 3, 1))  # single NCHW -> NHWC transpose
    body_feats = backbone_fwd(params, x)
    neck_feats = neck_fwd(params, body_feats)
    yolo_outputs = head_fwd(params, neck_feats)
    # TODO(synk): loss module (targets path) is an injected dependency; not implemented.
    if targets is not None:
        return yolo_outputs, None
    return yolo_outputs


# ----------------------------------------------------------------------------
if __name__ == "__main__":
    key = jax.random.PRNGKey(0)
    kx, kp = jax.random.split(key)

    # Small shapes consistent with the forward pass: batch=2, channels=4, spatial=16.
    x = jax.random.normal(kx, (2, 4, 16, 16), dtype=jnp.float32)
    params = init_yolox_params(kp, in_ch=4, widths=(8, 16, 32), neck_ch=16, num_classes=4)

    outputs = yolox_forward(params, x)
    for o in outputs:
        jax.block_until_ready(o)

    expected = [(2, 9, 16, 16), (2, 9, 8, 8), (2, 9, 4, 4)]
    assert [tuple(o.shape) for o in outputs] == expected, \
        f"unexpected output shapes: {[o.shape for o in outputs]}"
    assert all(bool(jnp.all(jnp.isfinite(o))) for o in outputs)

    print("KERNEL_OK")
</pallas_src>

<mosaic_0001>
module attributes {stable_mosaic.version = 11 : i64} {
  func.func @_matmul_bias_act_kernel(%arg0: i32, %arg1: memref<512x36xbf16, #tpu.memory_space<vmem>>, %arg2: memref<36x128xbf16, #tpu.memory_space<vmem>>, %arg3: memref<1x128xf32, #tpu.memory_space<vmem>>, %arg4: memref<512x128xbf16, #tpu.memory_space<vmem>>) attributes {dimension_semantics = [#tpu.dimension_semantics<parallel>], iteration_bounds = array<i64: 1>, scalar_prefetch = 0 : i64, scratch_operands = 0 : i64, tpu.core_type = #tpu.core_type<tc>, window_params = [{transform_indices = @transform_0, window_bounds = array<i64: 512, 36>}, {pipeline_mode = #tpu.pipeline_mode<synchronous>, transform_indices = @transform_1, window_bounds = array<i64: 36, 128>}, {pipeline_mode = #tpu.pipeline_mode<synchronous>, transform_indices = @transform_2, window_bounds = array<i64: 1, 128>}, {transform_indices = @transform_3, window_bounds = array<i64: 512, 128>}]} {
    %c0 = arith.constant 0 : index
    %c0_0 = arith.constant 0 : index
    %0 = vector.load %arg1[%c0, %c0_0] : memref<512x36xbf16, #tpu.memory_space<vmem>>, vector<512x36xbf16>
    %c0_1 = arith.constant 0 : index
    %c0_2 = arith.constant 0 : index
    %1 = vector.load %arg2[%c0_1, %c0_2] : memref<36x128xbf16, #tpu.memory_space<vmem>>, vector<36x128xbf16>
    %cst = arith.constant dense<0.000000e+00> : vector<512x128xf32>
    %2 = tpu.matmul %0, %1, %cst {dimension_numbers = #tpu.dot_dimension_numbers<[1], [0], [0], [1], [0, 0, 1, 1], [], []>} : vector<512x36xbf16>, vector<36x128xbf16>, vector<512x128xf32> -> vector<512x128xf32>
    %c0_3 = arith.constant 0 : index
    %c0_4 = arith.constant 0 : index
    %3 = vector.load %arg3[%c0_3, %c0_4] : memref<1x128xf32, #tpu.memory_space<vmem>>, vector<1x128xf32>
    %4 = vector.broadcast %3 : vector<1x128xf32> to vector<512x128xf32>
    %5 = arith.addf %2, %4 : vector<512x128xf32>
    %6 = arith.negf %5 : vector<512x128xf32>
    %7 = math.exp %6 : vector<512x128xf32>
    %cst_5 = arith.constant 1.000000e+00 : f32
    %8 = vector.broadcast %cst_5 : f32 to vector<512x128xf32>
    %9 = arith.addf %8, %7 : vector<512x128xf32>
    %10 = arith.divf %8, %9 : vector<512x128xf32>
    %11 = arith.mulf %5, %10 : vector<512x128xf32>
    %12 = arith.truncf %11 : vector<512x128xf32> to vector<512x128xbf16>
    %c0_6 = arith.constant 0 : index
    %c0_7 = arith.constant 0 : index
    %13 = vector.load %arg4[%c0_6, %c0_7] : memref<512x128xbf16, #tpu.memory_space<vmem>>, vector<512x128xbf16>
    tpu.vector_store %arg4[%c0_6, %c0_7], %12 {strides = array<i32>} : memref<512x128xbf16, #tpu.memory_space<vmem>>, vector<512x128xbf16>,
    return
  }
  func.func @transform_0(%arg0: i32) -> (i32, i32) {
    %c0_i32 = arith.constant 0 : i32
    %c0_i32_0 = arith.constant 0 : i32
    return %arg0, %c0_i32 : i32, i32
  }
  func.func @transform_1(%arg0: i32) -> (i32, i32) {
    %c0_i32 = arith.constant 0 : i32
    %c0_i32_0 = arith.constant 0 : i32
    %c0_i32_1 = arith.constant 0 : i32
    return %c0_i32, %c0_i32_0 : i32, i32
  }
  func.func @transform_2(%arg0: i32) -> (i32, i32) {
    %c0_i32 = arith.constant 0 : i32
    %c0_i32_0 = arith.constant 0 : i32
    %c0_i32_1 = arith.constant 0 : i32
    return %c0_i32, %c0_i32_0 : i32, i32
  }
  func.func @transform_3(%arg0: i32) -> (i32, i32) {
    %c0_i32 = arith.constant 0 : i32
    %c0_i32_0 = arith.constant 0 : i32
    return %arg0, %c0_i32 : i32, i32
  }
}

</mosaic_0001>

<llo_original>
// kernel: tpu_custom_call.1
$region0: #{tpu_custom_call.1}
  #allocation0 [shape = 'u32[]', space=smem, size = 0x4, offset = 0x4, fixed_abs, tag = 'smem constant byte address 0x4 - core index']
  #allocation1 [shape = 'u32[72,128]{1,0:T(1,128)}', space=vmem, size = 0x9000, scoped, tag = 'internal scratch']
  %s0 = inlined_call_operand.vmem [shape: bf16[512,36], index: 0, kind: input, shape index: {}]
  %s1 = inlined_call_operand.vmem [shape: bf16[36,128], index: 1, kind: input, shape index: {}]
  %s2 = inlined_call_operand.vmem [shape: f32[1,128], index: 2, kind: input, shape index: {}]
  %s3 = inlined_call_operand.hbm [shape: bf16[512,128], index: 3, kind: output, shape index: {}]
  %s4 = sld [smem:[#allocation0]]
  $region22: #{tpu_custom_call.1} parent=0
    _
  %s6 = ssub.s32 1, %s4
  %s7 = scalar_select 0, %s6, %s4
  $region1: #{tpu_custom_call.1} parent=0
    #allocation2 [shape = 'u8[131072]{0}', space=vmem, size = 0x20000, scoped, tag = 'output window, operand 0, single buffered']
    #allocation3 [shape = 's32[1]{0}', space=sflag, size = 0x4, scoped, tag = 'scoped memory for tpu_custom_call.1']
    %8 = vsyncpa [#allocation3], 0
    // Predicated region
    $region2: #{tpu_custom_call.1} parent=1 // pred_check
      _
    $region3: #{tpu_custom_call.1} parent=1 // pred_check_branch
      %10 = sbr.rel (0) target = $region5
    $region4: #{tpu_custom_call.1} parent=1 // pred_region
      _
    $region5: #{tpu_custom_call.1} parent=1 // pred_fallthru
      _
    // Predicated region
    $region6: #{tpu_custom_call.1} parent=1 // pred_check
      _
    $region7: #{tpu_custom_call.1} parent=1 // pred_check_branch
      %12 = sbr.rel (0) target = $region9
    $region8: #{tpu_custom_call.1} parent=1 // pred_region
      _
    $region9: #{tpu_custom_call.1} parent=1 // pred_fallthru
      _
    // Predicated region
    $region10: #{tpu_custom_call.1} parent=1 // pred_check
      _
    $region11: #{tpu_custom_call.1} parent=1 // pred_check_branch
      %14 = sbr.rel (0) target = $region13
    $region12: #{tpu_custom_call.1} parent=1 // pred_region
      _
    $region13: #{tpu_custom_call.1} parent=1 // pred_fallthru
      _
    %v16 = vld [vmem:[%s0] sm:$0xf]
    %v17 = vld [vmem:[%s0 + $0x4] sm:$0xf]
    %v18 = vld [vmem:[%s0 + $0x8] sm:$0xf]
    %v19 = vld [vmem:[%s0 + $0xc] sm:$0xf]
    %v20 = vld [vmem:[%s0 + $0x10] sm:$0xf]
    %v21 = vld [vmem:[%s0 + $0x14] sm:$0xf]
    %v22 = vld [vmem:[%s0 + $0x18] sm:$0xf]
    %v23 = vld [vmem:[%s0 + $0x1c] sm:$0xf]
    %v24 = vld [vmem:[%s0 + $0x20] sm:$0xf]
    %v25 = vld [vmem:[%s0 + $0x24] sm:$0xf]
    %v26 = vld [vmem:[%s0 + $0x28] sm:$0xf]
    %v27 = vld [vmem:[%s0 + $0x2c] sm:$0xf]
    %v28 = vld [vmem:[%s0 + $0x30] sm:$0xf]
    %v29 = vld [vmem:[%s0 + $0x34] sm:$0xf]
    %v30 = vld [vmem:[%s0 + $0x38] sm:$0xf]
    %v31 = vld [vmem:[%s0 + $0x3c] sm:$0xf]
    %v32 = vld [vmem:[%s0 + $0x40] sm:$0xf]
    %v33 = vld [vmem:[%s0 + $0x44] sm:$0xf]
    %v34 = vld [vmem:[%s0 + $0x48] sm:$0xf]
    %v35 = vld [vmem:[%s0 + $0x4c] sm:$0xf]
    %v36 = vld [vmem:[%s0 + $0x50] sm:$0xf]
    %v37 = vld [vmem:[%s0 + $0x54] sm:$0xf]
    %v38 = vld [vmem:[%s0 + $0x58] sm:$0xf]
    %v39 = vld [vmem:[%s0 + $0x5c] sm:$0xf]
    %v40 = vld [vmem:[%s0 + $0x60] sm:$0xf]
    %v41 = vld [vmem:[%s0 + $0x64] sm:$0xf]
    %v42 = vld [vmem:[%s0 + $0x68] sm:$0xf]
    %v43 = vld [vmem:[%s0 + $0x6c] sm:$0xf]
    %v44 = vld [vmem:[%s0 + $0x70] sm:$0xf]
    %v45 = vld [vmem:[%s0 + $0x74] sm:$0xf]
    %v46 = vld [vmem:[%s0 + $0x78] sm:$0xf]
    %v47 = vld [vmem:[%s0 + $0x7c] sm:$0xf]
    %v48 = vld [vmem:[%s0 + $0x80] sm:$0xf]
    %v49 = vld [vmem:[%s0 + $0x84] sm:$0xf]
    %v50 = vld [vmem:[%s0 + $0x88] sm:$0xf]
    %v51 = vld [vmem:[%s0 + $0x8c] sm:$0xf]
    %v52 = vld [vmem:[%s0 + $0x90] sm:$0xf]
    %v53 = vld [vmem:[%s0 + $0x94] sm:$0xf]
    %v54 = vld [vmem:[%s0 + $0x98] sm:$0xf]
    %v55 = vld [vmem:[%s0 + $0x9c] sm:$0xf]
    %v56 = vld [vmem:[%s0 + $0xa0] sm:$0xf]
    %v57 = vld [vmem:[%s0 + $0xa4] sm:$0xf]
    %v58 = vld [vmem:[%s0 + $0xa8] sm:$0xf]
    %v59 = vld [vmem:[%s0 + $0xac] sm:$0xf]
    %v60 = vld [vmem:[%s0 + $0xb0] sm:$0xf]
    %v61 = vld [vmem:[%s0 + $0xb4] sm:$0xf]
    %v62 = vld [vmem:[%s0 + $0xb8] sm:$0xf]
    %v63 = vld [vmem:[%s0 + $0xbc] sm:$0xf]
    %v64 = vld [vmem:[%s0 + $0xc0] sm:$0xf]
    %v65 = vld [vmem:[%s0 + $0xc4] sm:$0xf]
    %v66 = vld [vmem:[%s0 + $0xc8] sm:$0xf]
    %v67 = vld [vmem:[%s0 + $0xcc] sm:$0xf]
    %v68 = vld [vmem:[%s0 + $0xd0] sm:$0xf]
    %v69 = vld [vmem:[%s0 + $0xd4] sm:$0xf]
    %v70 = vld [vmem:[%s0 + $0xd8] sm:$0xf]
    %v71 = vld [vmem:[%s0 + $0xdc] sm:$0xf]
    %v72 = vld [vmem:[%s0 + $0xe0] sm:$0xf]
    %v73 = vld [vmem:[%s0 + $0xe4] sm:$0xf]
    %v74 = vld [vmem:[%s0 + $0xe8] sm:$0xf]
    %v75 = vld [vmem:[%s0 + $0xec] sm:$0xf]
    %v76 = vld [vmem:[%s0 + $0xf0] sm:$0xf]
    %v77 = vld [vmem:[%s0 + $0xf4] sm:$0xf]
    %v78 = vld [vmem:[%s0 + $0xf8] sm:$0xf]
    %v79 = vld [vmem:[%s0 + $0xfc] sm:$0xf]
    %v80 = vld [vmem:[%s1] sm:$0xf]
    %v81 = vld [vmem:[%s1 + $0x4] sm:$0xf]
    %v82 = vld [vmem:[%s1 + $0x8] sm:$0xf]
    %v83 = vld [vmem:[%s1 + $0xc] sm:$0xf]
    %v84 = vld [vmem:[%s1 + $0x10] sm:$0x3]
    %v85 = vld [vmem:[%s2] sm:$0x1]
    %v87 = vperm.slane %v85, 0
    %v153 = vunpack.c.l.b16 %v16
    %v154 = vunpack.c.l.b16 %v17
    %v155 = vunpack.c.l.b16 %v18
    %v156 = vunpack.c.l.b16 %v19
    %v157 = vunpack.c.l.b16 %v20
    %v158 = vunpack.c.l.b16 %v21
    %v159 = vunpack.c.l.b16 %v22
    %v160 = vunpack.c.l.b16 %v23
    %v161 = vunpack.c.l.b16 %v24
    %v162 = vunpack.c.l.b16 %v25
    %v163 = vunpack.c.l.b16 %v26
    %v164 = vunpack.c.l.b16 %v27
    %v165 = vunpack.c.l.b16 %v28
    %v166 = vunpack.c.l.b16 %v29
    %v167 = vunpack.c.l.b16 %v30
    %v168 = vunpack.c.l.b16 %v31
    %v169 = vunpack.c.l.b16 %v32
    %v170 = vunpack.c.l.b16 %v33
    %v171 = vunpack.c.l.b16 %v34
    %v172 = vunpack.c.l.b16 %v35
    %v173 = vunpack.c.l.b16 %v36
    %v174 = vunpack.c.l.b16 %v37
    %v175 = vunpack.c.l.b16 %v38
    %v176 = vunpack.c.l.b16 %v39
    %v177 = vunpack.c.l.b16 %v40
    %v178 = vunpack.c.l.b16 %v41
    %v179 = vunpack.c.l.b16 %v42
    %v180 = vunpack.c.l.b16 %v43
    %v181 = vunpack.c.l.b16 %v44
    %v182 = vunpack.c.l.b16 %v45
    %v183 = vunpack.c.l.b16 %v46
    %v184 = vunpack.c.l.b16 %v47
    %v185 = vunpack.c.l.b16 %v48
    %v186 = vunpack.c.l.b16 %v49
    %v187 = vunpack.c.l.b16 %v50
    %v188 = vunpack.c.l.b16 %v51
    %v189 = vunpack.c.l.b16 %v52
    %v190 = vunpack.c.l.b16 %v53
    %v191 = vunpack.c.l.b16 %v54
    %v192 = vunpack.c.l.b16 %v55
    %v193 = vunpack.c.l.b16 %v56
    %v194 = vunpack.c.l.b16 %v57
    %v195 = vunpack.c.l.b16 %v58
    %v196 = vunpack.c.l.b16 %v59
    %v197 = vunpack.c.l.b16 %v60
    %v198 = vunpack.c.l.b16 %v61
    %v199 = vunpack.c.l.b16 %v62
    %v200 = vunpack.c.l.b16 %v63
    %v201 = vunpack.c.l.b16 %v64
    %v202 = vunpack.c.l.b16 %v65
    %v203 = vunpack.c.l.b16 %v66
    %v204 = vunpack.c.l.b16 %v67
    %v205 = vunpack.c.l.b16 %v68
    %v206 = vunpack.c.l.b16 %v69
    %v207 = vunpack.c.l.b16 %v70
    %v208 = vunpack.c.l.b16 %v71
    %v209 = vunpack.c.l.b16 %v72
    %v210 = vunpack.c.l.b16 %v73
    %v211 = vunpack.c.l.b16 %v74
    %v212 = vunpack.c.l.b16 %v75
    %v213 = vunpack.c.l.b16 %v76
    %v214 = vunpack.c.l.b16 %v77
    %v215 = vunpack.c.l.b16 %v78
    %v216 = vunpack.c.l.b16 %v79
    %v217 = vpack.c.b16 %v154, %v153
    %v218 = vpack.c.b16 %v156, %v155
    %v219 = vpack.c.b16 %v158, %v157
    %v220 = vpack.c.b16 %v160, %v159
    %v221 = vpack.c.b16 %v162, %v161
    %v222 = vpack.c.b16 %v164, %v163
    %v223 = vpack.c.b16 %v166, %v165
    %v224 = vpack.c.b16 %v168, %v167
    %v225 = vpack.c.b16 %v170, %v169
    %v226 = vpack.c.b16 %v172, %v171
    %v227 = vpack.c.b16 %v174, %v173
    %v228 = vpack.c.b16 %v176, %v175
    %v229 = vpack.c.b16 %v178, %v177
    %v230 = vpack.c.b16 %v180, %v179
    %v231 = vpack.c.b16 %v182, %v181
    %v232 = vpack.c.b16 %v184, %v183
    %v233 = vpack.c.b16 %v186, %v185
    %v234 = vpack.c.b16 %v188, %v187
    %v235 = vpack.c.b16 %v190, %v189
    %v236 = vpack.c.b16 %v192, %v191
    %v237 = vpack.c.b16 %v194, %v193
    %v238 = vpack.c.b16 %v196, %v195
    %v239 = vpack.c.b16 %v198, %v197
    %v240 = vpack.c.b16 %v200, %v199
    %v241 = vpack.c.b16 %v202, %v201
    %v242 = vpack.c.b16 %v204, %v203
    %v243 = vpack.c.b16 %v206, %v205
    %v244 = vpack.c.b16 %v208, %v207
    %v245 = vpack.c.b16 %v210, %v209
    %v246 = vpack.c.b16 %v212, %v211
    %v247 = vpack.c.b16 %v214, %v213
    %v248 = vpack.c.b16 %v216, %v215
    %v254 = vunpack.c.l.b16 %v80
    %v255 = vunpack.c.l.b16 %v81
    %v256 = vunpack.c.l.b16 %v82
    %v257 = vunpack.c.l.b16 %v83
    %v258 = vunpack.c.l.b16 %v84
    %v259 = vpack.c.b16 %v255, %v254
    %v260 = vpack.c.b16 %v257, %v256
    %v261 = vpack.c.b16 %v258, %v258
    %vm264 = vcmask 293888
    %v266 = vsel %vm264, %v217, 0
    %v269 = vsel %vm264, %v218, 0
    %v272 = vsel %vm264, %v219, 0
    %v275 = vsel %vm264, %v220, 0
    %v278 = vsel %vm264, %v221, 0
    %v281 = vsel %vm264, %v222, 0
    %v284 = vsel %vm264, %v223, 0
    %v287 = vsel %vm264, %v224, 0
    %v290 = vsel %vm264, %v225, 0
    %v293 = vsel %vm264, %v226, 0
    %v296 = vsel %vm264, %v227, 0
    %v299 = vsel %vm264, %v228, 0
    %v302 = vsel %vm264, %v229, 0
    %v305 = vsel %vm264, %v230, 0
    %v308 = vsel %vm264, %v231, 0
    %v311 = vsel %vm264, %v232, 0
    %v314 = vsel %vm264, %v233, 0
    %v317 = vsel %vm264, %v234, 0
    %v320 = vsel %vm264, %v235, 0
    %v323 = vsel %vm264, %v236, 0
    %v326 = vsel %vm264, %v237, 0
    %v329 = vsel %vm264, %v238, 0
    %v332 = vsel %vm264, %v239, 0
    %v335 = vsel %vm264, %v240, 0
    %v338 = vsel %vm264, %v241, 0
    %v341 = vsel %vm264, %v242, 0
    %v344 = vsel %vm264, %v243, 0
    %v347 = vsel %vm264, %v244, 0
    %v350 = vsel %vm264, %v245, 0
    %v353 = vsel %vm264, %v246, 0
    %v356 = vsel %vm264, %v247, 0
    %v359 = vsel %vm264, %v248, 0
    %vm361 = vcmask 1041408
    %v363 = vsel %vm361, %v261, 0
    %365 = vmatpush.bf16.msra.mxu0 0
    %366 = vmatpush.bf16.msra.mxu0 0
    %367 = vmatpush.bf16.msra.mxu0 0
    %368 = vmatpush.bf16.msra.mxu0 0
    %369 = vmatpush.bf16.msra.mxu0 0
    %370 = vmatpush.bf16.msra.mxu0 %v363
    %371 = vmatpush.bf16.msra.mxu0 %v260
    %372 = vmatpush.bf16.msra.mxu0 %v259
    %373 = vmatmul.bf16.gmra.mxu0 %v266
    %v374 = vpop.f32.mrf.mxu0
    %v375 = vadd.f32 %v87, %v374
    %v376 = vpop.f32.mrf.mxu0
    %v377 = vadd.f32 %v87, %v376
    %378 = vmatmul.bf16.gmra.mxu0 %v269
    %v379 = vpop.f32.mrf.mxu0
    %v380 = vadd.f32 %v87, %v379
    %v381 = vpop.f32.mrf.mxu0
    %v382 = vadd.f32 %v87, %v381
    %383 = vmatmul.bf16.gmra.mxu0 %v272
    %v384 = vpop.f32.mrf.mxu0
    %v385 = vadd.f32 %v87, %v384
    %v386 = vpop.f32.mrf.mxu0
    %v387 = vadd.f32 %v87, %v386
    %388 = vmatmul.bf16.gmra.mxu0 %v275
    %v389 = vpop.f32.mrf.mxu0
    %v390 = vadd.f32 %v87, %v389
    %v391 = vpop.f32.mrf.mxu0
    %v392 = vadd.f32 %v87, %v391
    %393 = vmatmul.bf16.gmra.mxu0 %v278
    %v394 = vpop.f32.mrf.mxu0
    %v395 = vadd.f32 %v87, %v394
    %v396 = vpop.f32.mrf.mxu0
    %v397 = vadd.f32 %v87, %v396
    %398 = vmatmul.bf16.gmra.mxu0 %v281
    %v399 = vpop.f32.mrf.mxu0
    %v400 = vadd.f32 %v87, %v399
    %v401 = vpop.f32.mrf.mxu0
    %v402 = vadd.f32 %v87, %v401
    %403 = vmatmul.bf16.gmra.mxu0 %v284
    %v404 = vpop.f32.mrf.mxu0
    %v405 = vadd.f32 %v87, %v404
    %v406 = vpop.f32.mrf.mxu0
    %v407 = vadd.f32 %v87, %v406
    %408 = vmatmul.bf16.gmra.mxu0 %v287
    %v409 = vpop.f32.mrf.mxu0
    %v410 = vadd.f32 %v87, %v409
    %v411 = vpop.f32.mrf.mxu0
    %v412 = vadd.f32 %v87, %v411
    %413 = vmatmul.bf16.gmra.mxu0 %v290
    %v414 = vpop.f32.mrf.mxu0
    %v415 = vadd.f32 %v87, %v414
    %v416 = vpop.f32.mrf.mxu0
    %v417 = vadd.f32 %v87, %v416
    %418 = vmatmul.bf16.gmra.mxu0 %v293
    %v419 = vpop.f32.mrf.mxu0
    %v420 = vadd.f32 %v87, %v419
    %v421 = vpop.f32.mrf.mxu0
    %v422 = vadd.f32 %v87, %v421
    %423 = vmatmul.bf16.gmra.mxu0 %v296
    %v424 = vpop.f32.mrf.mxu0
    %v425 = vadd.f32 %v87, %v424
    %v426 = vpop.f32.mrf.mxu0
    %v427 = vadd.f32 %v87, %v426
    %428 = vmatmul.bf16.gmra.mxu0 %v299
    %v429 = vpop.f32.mrf.mxu0
    %v430 = vadd.f32 %v87, %v429
    %v431 = vpop.f32.mrf.mxu0
    %v432 = vadd.f32 %v87, %v431
    %433 = vmatmul.bf16.gmra.mxu0 %v302
    %v434 = vpop.f32.mrf.mxu0
    %v435 = vadd.f32 %v87, %v434
    %v436 = vpop.f32.mrf.mxu0
    %v437 = vadd.f32 %v87, %v436
    %438 = vmatmul.bf16.gmra.mxu0 %v305
    %v439 = vpop.f32.mrf.mxu0
    %v440 = vadd.f32 %v87, %v439
    %v441 = vpop.f32.mrf.mxu0
    %v442 = vadd.f32 %v87, %v441
    %443 = vmatmul.bf16.gmra.mxu0 %v308
    %v444 = vpop.f32.mrf.mxu0
    %v445 = vadd.f32 %v87, %v444
    %v446 = vpop.f32.mrf.mxu0
    %v447 = vadd.f32 %v87, %v446
    %448 = vmatmul.bf16.gmra.mxu0 %v311
    %v449 = vpop.f32.mrf.mxu0
    %v450 = vadd.f32 %v87, %v449
    %v451 = vpop.f32.mrf.mxu0
    %v452 = vadd.f32 %v87, %v451
    %453 = vmatmul.bf16.gmra.mxu0 %v314
    %v454 = vpop.f32.mrf.mxu0
    %v455 = vadd.f32 %v87, %v454
    %v456 = vpop.f32.mrf.mxu0
    %v457 = vadd.f32 %v87, %v456
    %458 = vmatmul.bf16.gmra.mxu0 %v317
    %v459 = vpop.f32.mrf.mxu0
    %v460 = vadd.f32 %v87, %v459
    %v461 = vpop.f32.mrf.mxu0
    %v462 = vadd.f32 %v87, %v461
    %463 = vmatmul.bf16.gmra.mxu0 %v320
    %v464 = vpop.f32.mrf.mxu0
    %v465 = vadd.f32 %v87, %v464
    %v466 = vpop.f32.mrf.mxu0
    %v467 = vadd.f32 %v87, %v466
    %468 = vmatmul.bf16.gmra.mxu0 %v323
    %v469 = vpop.f32.mrf.mxu0
    %v470 = vadd.f32 %v87, %v469
    %v471 = vpop.f32.mrf.mxu0
    %v472 = vadd.f32 %v87, %v471
    %473 = vmatmul.bf16.gmra.mxu0 %v326
    %v474 = vpop.f32.mrf.mxu0
    %v475 = vadd.f32 %v87, %v474
    %v476 = vpop.f32.mrf.mxu0
    %v477 = vadd.f32 %v87, %v476
    %478 = vmatmul.bf16.gmra.mxu0 %v329
    %v479 = vpop.f32.mrf.mxu0
    %v480 = vadd.f32 %v87, %v479
    %v481 = vpop.f32.mrf.mxu0
    %v482 = vadd.f32 %v87, %v481
    %483 = vmatmul.bf16.gmra.mxu0 %v332
    %v484 = vpop.f32.mrf.mxu0
    %v485 = vadd.f32 %v87, %v484
    %v486 = vpop.f32.mrf.mxu0
    %v487 = vadd.f32 %v87, %v486
    %488 = vmatmul.bf16.gmra.mxu0 %v335
    %v489 = vpop.f32.mrf.mxu0
    %v490 = vadd.f32 %v87, %v489
    %v491 = vpop.f32.mrf.mxu0
    %v492 = vadd.f32 %v87, %v491
    %493 = vmatmul.bf16.gmra.mxu0 %v338
    %v494 = vpop.f32.mrf.mxu0
    %v495 = vadd.f32 %v87, %v494
    %v496 = vpop.f32.mrf.mxu0
    %v497 = vadd.f32 %v87, %v496
    %498 = vmatmul.bf16.gmra.mxu0 %v341
    %v499 = vpop.f32.mrf.mxu0
    %v500 = vadd.f32 %v87, %v499
    %v501 = vpop.f32.mrf.mxu0
    %v502 = vadd.f32 %v87, %v501
    %503 = vmatmul.bf16.gmra.mxu0 %v344
    %v504 = vpop.f32.mrf.mxu0
    %v505 = vadd.f32 %v87, %v504
    %v506 = vpop.f32.mrf.mxu0
    %v507 = vadd.f32 %v87, %v506
    %508 = vmatmul.bf16.gmra.mxu0 %v347
    %v509 = vpop.f32.mrf.mxu0
    %v510 = vadd.f32 %v87, %v509
    %v511 = vpop.f32.mrf.mxu0
    %v512 = vadd.f32 %v87, %v511
    %513 = vmatmul.bf16.gmra.mxu0 %v350
    %v514 = vpop.f32.mrf.mxu0
    %v515 = vadd.f32 %v87, %v514
    %v516 = vpop.f32.mrf.mxu0
    %v517 = vadd.f32 %v87, %v516
    %518 = vmatmul.bf16.gmra.mxu0 %v353
    %v519 = vpop.f32.mrf.mxu0
    %v520 = vadd.f32 %v87, %v519
    %v521 = vpop.f32.mrf.mxu0
    %v522 = vadd.f32 %v87, %v521
    %523 = vmatmul.bf16.gmra.mxu0 %v356
    %v524 = vpop.f32.mrf.mxu0
    %v525 = vadd.f32 %v87, %v524
    %v526 = vpop.f32.mrf.mxu0
    %v527 = vadd.f32 %v87, %v526
    %528 = vmatmul.bf16.gmra.mxu0 %v359
    %v529 = vpop.f32.mrf.mxu0
    %v530 = vadd.f32 %v87, %v529
    %v531 = vpop.f32.mrf.mxu0
    %v532 = vadd.f32 %v87, %v531
    %533 = vdwg.mxu0
    %v534 = vxor.u32 %v375, 2147483648
    %v535 = vxor.u32 %v377, 2147483648
    %v536 = vxor.u32 %v380, 2147483648
    %v537 = vxor.u32 %v382, 2147483648
    %v538 = vxor.u32 %v385, 2147483648
    %v539 = vxor.u32 %v387, 2147483648
    %v540 = vxor.u32 %v390, 2147483648
    %v541 = vxor.u32 %v392, 2147483648
    %v542 = vxor.u32 %v395, 2147483648
    %v543 = vxor.u32 %v397, 2147483648
    %v544 = vxor.u32 %v400, 2147483648
    %v545 = vxor.u32 %v402, 2147483648
    %v546 = vxor.u32 %v405, 2147483648
    %v547 = vxor.u32 %v407, 2147483648
    %v548 = vxor.u32 %v410, 2147483648
    %v549 = vxor.u32 %v412, 2147483648
    %v550 = vxor.u32 %v415, 2147483648
    %v551 = vxor.u32 %v417, 2147483648
    %v552 = vxor.u32 %v420, 2147483648
    %v553 = vxor.u32 %v422, 2147483648
    %v554 = vxor.u32 %v425, 2147483648
    %v555 = vxor.u32 %v427, 2147483648
    %v556 = vxor.u32 %v430, 2147483648
    %v557 = vxor.u32 %v432, 2147483648
    %v558 = vxor.u32 %v435, 2147483648
    %v559 = vxor.u32 %v437, 2147483648
    %v560 = vxor.u32 %v440, 2147483648
    %v561 = vxor.u32 %v442, 2147483648
    %v562 = vxor.u32 %v445, 2147483648
    %v563 = vxor.u32 %v447, 2147483648
    %v564 = vxor.u32 %v450, 2147483648
    %v565 = vxor.u32 %v452, 2147483648
    %v566 = vxor.u32 %v455, 2147483648
    %v567 = vxor.u32 %v457, 2147483648
    %v568 = vxor.u32 %v460, 2147483648
    %v569 = vxor.u32 %v462, 2147483648
    %v570 = vxor.u32 %v465, 2147483648
    %v571 = vxor.u32 %v467, 2147483648
    %v572 = vxor.u32 %v470, 2147483648
    %v573 = vxor.u32 %v472, 2147483648
    %v574 = vxor.u32 %v475, 2147483648
    %v575 = vxor.u32 %v477, 2147483648
    %v576 = vxor.u32 %v480, 2147483648
    %v577 = vxor.u32 %v482, 2147483648
    %v578 = vxor.u32 %v485, 2147483648
    %v579 = vxor.u32 %v487, 2147483648
    %v580 = vxor.u32 %v490, 2147483648
    %v581 = vxor.u32 %v492, 2147483648
    %v582 = vxor.u32 %v495, 2147483648
    %v583 = vxor.u32 %v497, 2147483648
    %v584 = vxor.u32 %v500, 2147483648
    %v585 = vxor.u32 %v502, 2147483648
    %v586 = vxor.u32 %v505, 2147483648
    %v587 = vxor.u32 %v507, 2147483648
    %v588 = vxor.u32 %v510, 2147483648
    %v589 = vxor.u32 %v512, 2147483648
    %v590 = vxor.u32 %v515, 2147483648
    %v591 = vxor.u32 %v517, 2147483648
    %v592 = vxor.u32 %v520, 2147483648
    %v593 = vxor.u32 %v522, 2147483648
    %v594 = vxor.u32 %v525, 2147483648
    %v595 = vxor.u32 %v527, 2147483648
    %v596 = vxor.u32 %v530, 2147483648
    %v597 = vxor.u32 %v532, 2147483648
    %v598 = vmul.f32 %v534, 1.442695
    %v599 = vpow.pop %v598
    %v600 = vmul.f32 %v535, 1.442695
    %v601 = vpow.pop %v600
    %v602 = vmul.f32 %v536, 1.442695
    %v603 = vpow.pop %v602
    %v604 = vmul.f32 %v537, 1.442695
    %v605 = vpow.pop %v604
    %v606 = vmul.f32 %v538, 1.442695
    %v607 = vpow.pop %v606
    %v608 = vmul.f32 %v539, 1.442695
    %v609 = vpow.pop %v608
    %v610 = vmul.f32 %v540, 1.442695
    %v611 = vpow.pop %v610
    %v612 = vmul.f32 %v541, 1.442695
    %v613 = vpow.pop %v612
    %v614 = vmul.f32 %v542, 1.442695
    %v615 = vpow.pop %v614
    %v616 = vmul.f32 %v543, 1.442695
    %v617 = vpow.pop %v616
    %v618 = vmul.f32 %v544, 1.442695
    %v619 = vpow.pop %v618
    %v620 = vmul.f32 %v545, 1.442695
    %v621 = vpow.pop %v620
    %v622 = vmul.f32 %v546, 1.442695
    %v623 = vpow.pop %v622
    %v624 = vmul.f32 %v547, 1.442695
    %v625 = vpow.pop %v624
    %v626 = vmul.f32 %v548, 1.442695
    %v627 = vpow.pop %v626
    %v628 = vmul.f32 %v549, 1.442695
    %v629 = vpow.pop %v628
    %v630 = vmul.f32 %v550, 1.442695
    %v631 = vpow.pop %v630
    %v632 = vmul.f32 %v551, 1.442695
    %v633 = vpow.pop %v632
    %v634 = vmul.f32 %v552, 1.442695
    %v635 = vpow.pop %v634
    %v636 = vmul.f32 %v553, 1.442695
    %v637 = vpow.pop %v636
    %v638 = vmul.f32 %v554, 1.442695
    %v639 = vpow.pop %v638
    %v640 = vmul.f32 %v555, 1.442695
    %v641 = vpow.pop %v640
    %v642 = vmul.f32 %v556, 1.442695
    %v643 = vpow.pop %v642
    %v644 = vmul.f32 %v557, 1.442695
    %v645 = vpow.pop %v644
    %v646 = vmul.f32 %v558, 1.442695
    %v647 = vpow.pop %v646
    %v648 = vmul.f32 %v559, 1.442695
    %v649 = vpow.pop %v648
    %v650 = vmul.f32 %v560, 1.442695
    %v651 = vpow.pop %v650
    %v652 = vmul.f32 %v561, 1.442695
    %v653 = vpow.pop %v652
    %v654 = vmul.f32 %v562, 1.442695
    %v655 = vpow.pop %v654
    %v656 = vmul.f32 %v563, 1.442695
    %v657 = vpow.pop %v656
    %v658 = vmul.f32 %v564, 1.442695
    %v659 = vpow.pop %v658
    %v660 = vmul.f32 %v565, 1.442695
    %v661 = vpow.pop %v660
    %v662 = vmul.f32 %v566, 1.442695
    %v663 = vpow.pop %v662
    %v664 = vmul.f32 %v567, 1.442695
    %v665 = vpow.pop %v664
    %v666 = vmul.f32 %v568, 1.442695
    %v667 = vpow.pop %v666
    %v668 = vmul.f32 %v569, 1.442695
    %v669 = vpow.pop %v668
    %v670 = vmul.f32 %v570, 1.442695
    %v671 = vpow.pop %v670
    %v672 = vmul.f32 %v571, 1.442695
    %v673 = vpow.pop %v672
    %v674 = vmul.f32 %v572, 1.442695
    %v675 = vpow.pop %v674
    %v676 = vmul.f32 %v573, 1.442695
    %v677 = vpow.pop %v676
    %v678 = vmul.f32 %v574, 1.442695
    %v679 = vpow.pop %v678
    %v680 = vmul.f32 %v575, 1.442695
    %v681 = vpow.pop %v680
    %v682 = vmul.f32 %v576, 1.442695
    %v683 = vpow.pop %v682
    %v684 = vmul.f32 %v577, 1.442695
    %v685 = vpow.pop %v684
    %v686 = vmul.f32 %v578, 1.442695
    %v687 = vpow.pop %v686
    %v688 = vmul.f32 %v579, 1.442695
    %v689 = vpow.pop %v688
    %v690 = vmul.f32 %v580, 1.442695
    %v691 = vpow.pop %v690
    %v692 = vmul.f32 %v581, 1.442695
    %v693 = vpow.pop %v692
    %v694 = vmul.f32 %v582, 1.442695
    %v695 = vpow.pop %v694
    %v696 = vmul.f32 %v583, 1.442695
    %v697 = vpow.pop %v696
    %v698 = vmul.f32 %v584, 1.442695
    %v699 = vpow.pop %v698
    %v700 = vmul.f32 %v585, 1.442695
    %v701 = vpow.pop %v700
    %v702 = vmul.f32 %v586, 1.442695
    %v703 = vpow.pop %v702
    %v704 = vmul.f32 %v587, 1.442695
    %v705 = vpow.pop %v704
    %v706 = vmul.f32 %v588, 1.442695
    %v707 = vpow.pop %v706
    %v708 = vmul.f32 %v589, 1.442695
    %v709 = vpow.pop %v708
    %v710 = vmul.f32 %v590, 1.442695
    %v711 = vpow.pop %v710
    %v712 = vmul.f32 %v591, 1.442695
    %v713 = vpow.pop %v712
    %v714 = vmul.f32 %v592, 1.442695
    %v715 = vpow.pop %v714
    %v716 = vmul.f32 %v593, 1.442695
    %v717 = vpow.pop %v716
    %v718 = vmul.f32 %v594, 1.442695
    %v719 = vpow.pop %v718
    %v720 = vmul.f32 %v595, 1.442695
    %v721 = vpow.pop %v720
    %v722 = vmul.f32 %v596, 1.442695
    %v723 = vpow.pop %v722
    %v724 = vmul.f32 %v597, 1.442695
    %v725 = vpow.pop %v724
    %v726 = vadd.f32 %v599, 1.0
    %v727 = vadd.f32 %v601, 1.0
    %v728 = vadd.f32 %v603, 1.0
    %v729 = vadd.f32 %v605, 1.0
    %v730 = vadd.f32 %v607, 1.0
    %v731 = vadd.f32 %v609, 1.0
    %v732 = vadd.f32 %v611, 1.0
    %v733 = vadd.f32 %v613, 1.0
    %v734 = vadd.f32 %v615, 1.0
    %v735 = vadd.f32 %v617, 1.0
    %v736 = vadd.f32 %v619, 1.0
    %v737 = vadd.f32 %v621, 1.0
    %v738 = vadd.f32 %v623, 1.0
    %v739 = vadd.f32 %v625, 1.0
    %v740 = vadd.f32 %v627, 1.0
    %v741 = vadd.f32 %v629, 1.0
    %v742 = vadd.f32 %v631, 1.0
    %v743 = vadd.f32 %v633, 1.0
    %v744 = vadd.f32 %v635, 1.0
    %v745 = vadd.f32 %v637, 1.0
    %v746 = vadd.f32 %v639, 1.0
    %v747 = vadd.f32 %v641, 1.0
    %v748 = vadd.f32 %v643, 1.0
    %v749 = vadd.f32 %v645, 1.0
    %v750 = vadd.f32 %v647, 1.0
    %v751 = vadd.f32 %v649, 1.0
    %v752 = vadd.f32 %v651, 1.0
    %v753 = vadd.f32 %v653, 1.0
    %v754 = vadd.f32 %v655, 1.0
    %v755 = vadd.f32 %v657, 1.0
    %v756 = vadd.f32 %v659, 1.0
    %v757 = vadd.f32 %v661, 1.0
    %v758 = vadd.f32 %v663, 1.0
    %v759 = vadd.f32 %v665, 1.0
    %v760 = vadd.f32 %v667, 1.0
    %v761 = vadd.f32 %v669, 1.0
    %v762 = vadd.f32 %v671, 1.0
    %v763 = vadd.f32 %v673, 1.0
    %v764 = vadd.f32 %v675, 1.0
    %v765 = vadd.f32 %v677, 1.0
    %v766 = vadd.f32 %v679, 1.0
    %v767 = vadd.f32 %v681, 1.0
    %v768 = vadd.f32 %v683, 1.0
    %v769 = vadd.f32 %v685, 1.0
    %v770 = vadd.f32 %v687, 1.0
    %v771 = vadd.f32 %v689, 1.0
    %v772 = vadd.f32 %v691, 1.0
    %v773 = vadd.f32 %v693, 1.0
    %v774 = vadd.f32 %v695, 1.0
    %v775 = vadd.f32 %v697, 1.0
    %v776 = vadd.f32 %v699, 1.0
    %v777 = vadd.f32 %v701, 1.0
    %v778 = vadd.f32 %v703, 1.0
    %v779 = vadd.f32 %v705, 1.0
    %v780 = vadd.f32 %v707, 1.0
    %v781 = vadd.f32 %v709, 1.0
    %v782 = vadd.f32 %v711, 1.0
    %v783 = vadd.f32 %v713, 1.0
    %v784 = vadd.f32 %v715, 1.0
    %v785 = vadd.f32 %v717, 1.0
    %v786 = vadd.f32 %v719, 1.0
    %v787 = vadd.f32 %v721, 1.0
    %v788 = vadd.f32 %v723, 1.0
    %v789 = vadd.f32 %v725, 1.0
    %v790 = vrcp.pop %v726
    %v791 = vmul.f32 %v726, %v790
    %v792 = vsub.f32 1.0, %v791
    %v793 = vmul.f32 %v790, %v792
    %v794 = vadd.f32 %v790, %v793
    %vm795 = vweird.f32 %v726
    %vm796 = vweird.f32 %v790
    %vm797 = vmor %vm795, %vm796
    %v798 = vsel %vm797, %v790, %v794
    %v799 = vand.u32 2147483647, %v726
    %vm800 = vcmp.eq.f32.partialorder %v799, 8.507059e+37
    %v801 = vand.u32 %v726, 2147483648
    %v802 = vor.u32 1.1754944e-38, %v801
    %v803 = vsel %vm800, %v802, %v798
    %v804 = vmul.f32 1.0, %v803
    %v805 = vrcp.pop %v727
    %v806 = vmul.f32 %v727, %v805
    %v807 = vsub.f32 1.0, %v806
    %v808 = vmul.f32 %v805, %v807
    %v809 = vadd.f32 %v805, %v808
    %vm810 = vweird.f32 %v727
    %vm811 = vweird.f32 %v805
    %vm812 = vmor %vm810, %vm811
    %v813 = vsel %vm812, %v805, %v809
    %v814 = vand.u32 2147483647, %v727
    %vm815 = vcmp.eq.f32.partialorder %v814, 8.507059e+37
    %v816 = vand.u32 %v727, 2147483648
    %v817 = vor.u32 1.1754944e-38, %v816
    %v818 = vsel %vm815, %v817, %v813
    %v819 = vmul.f32 1.0, %v818
    %v820 = vrcp.pop %v728
    %v821 = vmul.f32 %v728, %v820
    %v822 = vsub.f32 1.0, %v821
    %v823 = vmul.f32 %v820, %v822
    %v824 = vadd.f32 %v820, %v823
    %vm825 = vweird.f32 %v728
    %vm826 = vweird.f32 %v820
    %vm827 = vmor %vm825, %vm826
    %v828 = vsel %vm827, %v820, %v824
    %v829 = vand.u32 2147483647, %v728
    %vm830 = vcmp.eq.f32.partialorder %v829, 8.507059e+37
    %v831 = vand.u32 %v728, 2147483648
    %v832 = vor.u32 1.1754944e-38, %v831
    %v833 = vsel %vm830, %v832, %v828
    %v834 = vmul.f32 1.0, %v833
    %v835 = vrcp.pop %v729
    %v836 = vmul.f32 %v729, %v835
    %v837 = vsub.f32 1.0, %v836
    %v838 = vmul.f32 %v835, %v837
    %v839 = vadd.f32 %v835, %v838
    %vm840 = vweird.f32 %v729
    %vm841 = vweird.f32 %v835
    %vm842 = vmor %vm840, %vm841
    %v843 = vsel %vm842, %v835, %v839
    %v844 = vand.u32 2147483647, %v729
    %vm845 = vcmp.eq.f32.partialorder %v844, 8.507059e+37
    %v846 = vand.u32 %v729, 2147483648
    %v847 = vor.u32 1.1754944e-38, %v846
    %v848 = vsel %vm845, %v847, %v843
    %v849 = vmul.f32 1.0, %v848
    %v850 = vrcp.pop %v730
    %v851 = vmul.f32 %v730, %v850
    %v852 = vsub.f32 1.0, %v851
    %v853 = vmul.f32 %v850, %v852
    %v854 = vadd.f32 %v850, %v853
    %vm855 = vweird.f32 %v730
    %vm856 = vweird.f32 %v850
    %vm857 = vmor %vm855, %vm856
    %v858 = vsel %vm857, %v850, %v854
    %v859 = vand.u32 2147483647, %v730
    %vm860 = vcmp.eq.f32.partialorder %v859, 8.507059e+37
    %v861 = vand.u32 %v730, 2147483648
    %v862 = vor.u32 1.1754944e-38, %v861
    %v863 = vsel %vm860, %v862, %v858
    %v864 = vmul.f32 1.0, %v863
    %v865 = vrcp.pop %v731
    %v866 = vmul.f32 %v731, %v865
    %v867 = vsub.f32 1.0, %v866
    %v868 = vmul.f32 %v865, %v867
    %v869 = vadd.f32 %v865, %v868
    %vm870 = vweird.f32 %v731
    %vm871 = vweird.f32 %v865
    %vm872 = vmor %vm870, %vm871
    %v873 = vsel %vm872, %v865, %v869
    %v874 = vand.u32 2147483647, %v731
    %vm875 = vcmp.eq.f32.partialorder %v874, 8.507059e+37
    %v876 = vand.u32 %v731, 2147483648
    %v877 = vor.u32 1.1754944e-38, %v876
    %v878 = vsel %vm875, %v877, %v873
    %v879 = vmul.f32 1.0, %v878
    %v880 = vrcp.pop %v732
    %v881 = vmul.f32 %v732, %v880
    %v882 = vsub.f32 1.0, %v881
    %v883 = vmul.f32 %v880, %v882
    %v884 = vadd.f32 %v880, %v883
    %vm885 = vweird.f32 %v732
    %vm886 = vweird.f32 %v880
    %vm887 = vmor %vm885, %vm886
    %v888 = vsel %vm887, %v880, %v884
    %v889 = vand.u32 2147483647, %v732
    %vm890 = vcmp.eq.f32.partialorder %v889, 8.507059e+37
    %v891 = vand.u32 %v732, 2147483648
    %v892 = vor.u32 1.1754944e-38, %v891
    %v893 = vsel %vm890, %v892, %v888
    %v894 = vmul.f32 1.0, %v893
    %v895 = vrcp.pop %v733
    %v896 = vmul.f32 %v733, %v895
    %v897 = vsub.f32 1.0, %v896
    %v898 = vmul.f32 %v895, %v897
    %v899 = vadd.f32 %v895, %v898
    %vm900 = vweird.f32 %v733
    %vm901 = vweird.f32 %v895
    %vm902 = vmor %vm900, %vm901
    %v903 = vsel %vm902, %v895, %v899
    %v904 = vand.u32 2147483647, %v733
    %vm905 = vcmp.eq.f32.partialorder %v904, 8.507059e+37
    %v906 = vand.u32 %v733, 2147483648
    %v907 = vor.u32 1.1754944e-38, %v906
    %v908 = vsel %vm905, %v907, %v903
    %v909 = vmul.f32 1.0, %v908
    %v910 = vrcp.pop %v734
    %v911 = vmul.f32 %v734, %v910
    %v912 = vsub.f32 1.0, %v911
    %v913 = vmul.f32 %v910, %v912
    %v914 = vadd.f32 %v910, %v913
    %vm915 = vweird.f32 %v734
    %vm916 = vweird.f32 %v910
    %vm917 = vmor %vm915, %vm916
    %v918 = vsel %vm917, %v910, %v914
    %v919 = vand.u32 2147483647, %v734
    %vm920 = vcmp.eq.f32.partialorder %v919, 8.507059e+37
    %v921 = vand.u32 %v734, 2147483648
    %v922 = vor.u32 1.1754944e-38, %v921
    %v923 = vsel %vm920, %v922, %v918
    %v924 = vmul.f32 1.0, %v923
    %v925 = vrcp.pop %v735
    %v926 = vmul.f32 %v735, %v925
    %v927 = vsub.f32 1.0, %v926
    %v928 = vmul.f32 %v925, %v927
    %v929 = vadd.f32 %v925, %v928
    %vm930 = vweird.f32 %v735
    %vm931 = vweird.f32 %v925
    %vm932 = vmor %vm930, %vm931
    %v933 = vsel %vm932, %v925, %v929
    %v934 = vand.u32 2147483647, %v735
    %vm935 = vcmp.eq.f32.partialorder %v934, 8.507059e+37
    %v936 = vand.u32 %v735, 2147483648
    %v937 = vor.u32 1.1754944e-38, %v936
    %v938 = vsel %vm935, %v937, %v933
    %v939 = vmul.f32 1.0, %v938
    %v940 = vrcp.pop %v736
    %v941 = vmul.f32 %v736, %v940
    %v942 = vsub.f32 1.0, %v941
    %v943 = vmul.f32 %v940, %v942
    %v944 = vadd.f32 %v940, %v943
    %vm945 = vweird.f32 %v736
    %vm946 = vweird.f32 %v940
    %vm947 = vmor %vm945, %vm946
    %v948 = vsel %vm947, %v940, %v944
    %v949 = vand.u32 2147483647, %v736
    %vm950 = vcmp.eq.f32.partialorder %v949, 8.507059e+37
    %v951 = vand.u32 %v736, 2147483648
    %v952 = vor.u32 1.1754944e-38, %v951
    %v953 = vsel %vm950, %v952, %v948
    %v954 = vmul.f32 1.0, %v953
    %v955 = vrcp.pop %v737
    %v956 = vmul.f32 %v737, %v955
    %v957 = vsub.f32 1.0, %v956
    %v958 = vmul.f32 %v955, %v957
    %v959 = vadd.f32 %v955, %v958
    %vm960 = vweird.f32 %v737
    %vm961 = vweird.f32 %v955
    %vm962 = vmor %vm960, %vm961
    %v963 = vsel %vm962, %v955, %v959
    %v964 = vand.u32 2147483647, %v737
    %vm965 = vcmp.eq.f32.partialorder %v964, 8.507059e+37
    %v966 = vand.u32 %v737, 2147483648
    %v967 = vor.u32 1.1754944e-38, %v966
    %v968 = vsel %vm965, %v967, %v963
    %v969 = vmul.f32 1.0, %v968
    %v970 = vrcp.pop %v738
    %v971 = vmul.f32 %v738, %v970
    %v972 = vsub.f32 1.0, %v971
    %v973 = vmul.f32 %v970, %v972
    %v974 = vadd.f32 %v970, %v973
    %vm975 = vweird.f32 %v738
    %vm976 = vweird.f32 %v970
    %vm977 = vmor %vm975, %vm976
    %v978 = vsel %vm977, %v970, %v974
    %v979 = vand.u32 2147483647, %v738
    %vm980 = vcmp.eq.f32.partialorder %v979, 8.507059e+37
    %v981 = vand.u32 %v738, 2147483648
    %v982 = vor.u32 1.1754944e-38, %v981
    %v983 = vsel %vm980, %v982, %v978
    %v984 = vmul.f32 1.0, %v983
    %v985 = vrcp.pop %v739
    %v986 = vmul.f32 %v739, %v985
    %v987 = vsub.f32 1.0, %v986
    %v988 = vmul.f32 %v985, %v987
    %v989 = vadd.f32 %v985, %v988
    %vm990 = vweird.f32 %v739
    %vm991 = vweird.f32 %v985
    %vm992 = vmor %vm990, %vm991
    %v993 = vsel %vm992, %v985, %v989
    %v994 = vand.u32 2147483647, %v739
    %vm995 = vcmp.eq.f32.partialorder %v994, 8.507059e+37
    %v996 = vand.u32 %v739, 2147483648
    %v997 = vor.u32 1.1754944e-38, %v996
    %v998 = vsel %vm995, %v997, %v993
    %v999 = vmul.f32 1.0, %v998
    %v1000 = vrcp.pop %v740
    %v1001 = vmul.f32 %v740, %v1000
    %v1002 = vsub.f32 1.0, %v1001
    %v1003 = vmul.f32 %v1000, %v1002
    %v1004 = vadd.f32 %v1000, %v1003
    %vm1005 = vweird.f32 %v740
    %vm1006 = vweird.f32 %v1000
    %vm1007 = vmor %vm1005, %vm1006
    %v1008 = vsel %vm1007, %v1000, %v1004
    %v1009 = vand.u32 2147483647, %v740
    %vm1010 = vcmp.eq.f32.partialorder %v1009, 8.507059e+37
    %v1011 = vand.u32 %v740, 2147483648
    %v1012 = vor.u32 1.1754944e-38, %v1011
    %v1013 = vsel %vm1010, %v1012, %v1008
    %v1014 = vmul.f32 1.0, %v1013
    %v1015 = vrcp.pop %v741
    %v1016 = vmul.f32 %v741, %v1015
    %v1017 = vsub.f32 1.0, %v1016
    %v1018 = vmul.f32 %v1015, %v1017
    %v1019 = vadd.f32 %v1015, %v1018
    %vm1020 = vweird.f32 %v741
    %vm1021 = vweird.f32 %v1015
    %vm1022 = vmor %vm1020, %vm1021
    %v1023 = vsel %vm1022, %v1015, %v1019
    %v1024 = vand.u32 2147483647, %v741
    %vm1025 = vcmp.eq.f32.partialorder %v1024, 8.507059e+37
    %v1026 = vand.u32 %v741, 2147483648
    %v1027 = vor.u32 1.1754944e-38, %v1026
    %v1028 = vsel %vm1025, %v1027, %v1023
    %v1029 = vmul.f32 1.0, %v1028
    %v1030 = vrcp.pop %v742
    %v1031 = vmul.f32 %v742, %v1030
    %v1032 = vsub.f32 1.0, %v1031
    %v1033 = vmul.f32 %v1030, %v1032
    %v1034 = vadd.f32 %v1030, %v1033
    %vm1035 = vweird.f32 %v742
    %vm1036 = vweird.f32 %v1030
    %vm1037 = vmor %vm1035, %vm1036
    %v1038 = vsel %vm1037, %v1030, %v1034
    %v1039 = vand.u32 2147483647, %v742
    %vm1040 = vcmp.eq.f32.partialorder %v1039, 8.507059e+37
    %v1041 = vand.u32 %v742, 2147483648
    %v1042 = vor.u32 1.1754944e-38, %v1041
    %v1043 = vsel %vm1040, %v1042, %v1038
    %v1044 = vmul.f32 1.0, %v1043
    %v1045 = vrcp.pop %v743
    %v1046 = vmul.f32 %v743, %v1045
    %v1047 = vsub.f32 1.0, %v1046
    %v1048 = vmul.f32 %v1045, %v1047
    %v1049 = vadd.f32 %v1045, %v1048
    %vm1050 = vweird.f32 %v743
    %vm1051 = vweird.f32 %v1045
    %vm1052 = vmor %vm1050, %vm1051
    %v1053 = vsel %vm1052, %v1045, %v1049
    %v1054 = vand.u32 2147483647, %v743
    %vm1055 = vcmp.eq.f32.partialorder %v1054, 8.507059e+37
    %v1056 = vand.u32 %v743, 2147483648
    %v1057 = vor.u32 1.1754944e-38, %v1056
    %v1058 = vsel %vm1055, %v1057, %v1053
    %v1059 = vmul.f32 1.0, %v1058
    %v1060 = vrcp.pop %v744
    %v1061 = vmul.f32 %v744, %v1060
    %v1062 = vsub.f32 1.0, %v1061
    %v1063 = vmul.f32 %v1060, %v1062
    %v1064 = vadd.f32 %v1060, %v1063
    %vm1065 = vweird.f32 %v744
    %vm1066 = vweird.f32 %v1060
    %vm1067 = vmor %vm1065, %vm1066
    %v1068 = vsel %vm1067, %v1060, %v1064
    %v1069 = vand.u32 2147483647, %v744
    %vm1070 = vcmp.eq.f32.partialorder %v1069, 8.507059e+37
    %v1071 = vand.u32 %v744, 2147483648
    %v1072 = vor.u32 1.1754944e-38, %v1071
    %v1073 = vsel %vm1070, %v1072, %v1068
    %v1074 = vmul.f32 1.0, %v1073
    %v1075 = vrcp.pop %v745
    %v1076 = vmul.f32 %v745, %v1075
    %v1077 = vsub.f32 1.0, %v1076
    %v1078 = vmul.f32 %v1075, %v1077
    %v1079 = vadd.f32 %v1075, %v1078
    %vm1080 = vweird.f32 %v745
    %vm1081 = vweird.f32 %v1075
    %vm1082 = vmor %vm1080, %vm1081
    %v1083 = vsel %vm1082, %v1075, %v1079
    %v1084 = vand.u32 2147483647, %v745
    %vm1085 = vcmp.eq.f32.partialorder %v1084, 8.507059e+37
    %v1086 = vand.u32 %v745, 2147483648
    %v1087 = vor.u32 1.1754944e-38, %v1086
    %v1088 = vsel %vm1085, %v1087, %v1083
    %v1089 = vmul.f32 1.0, %v1088
    %v1090 = vrcp.pop %v746
    %v1091 = vmul.f32 %v746, %v1090
    %v1092 = vsub.f32 1.0, %v1091
    %v1093 = vmul.f32 %v1090, %v1092
    %v1094 = vadd.f32 %v1090, %v1093
    %vm1095 = vweird.f32 %v746
    %vm1096 = vweird.f32 %v1090
    %vm1097 = vmor %vm1095, %vm1096
    %v1098 = vsel %vm1097, %v1090, %v1094
    %v1099 = vand.u32 2147483647, %v746
    %vm1100 = vcmp.eq.f32.partialorder %v1099, 8.507059e+37
    %v1101 = vand.u32 %v746, 2147483648
    %v1102 = vor.u32 1.1754944e-38, %v1101
    %v1103 = vsel %vm1100, %v1102, %v1098
    %v1104 = vmul.f32 1.0, %v1103
    %v1105 = vrcp.pop %v747
    %v1106 = vmul.f32 %v747, %v1105
    %v1107 = vsub.f32 1.0, %v1106
    %v1108 = vmul.f32 %v1105, %v1107
    %v1109 = vadd.f32 %v1105, %v1108
    %vm1110 = vweird.f32 %v747
    %vm1111 = vweird.f32 %v1105
    %vm1112 = vmor %vm1110, %vm1111
    %v1113 = vsel %vm1112, %v1105, %v1109
    %v1114 = vand.u32 2147483647, %v747
    %vm1115 = vcmp.eq.f32.partialorder %v1114, 8.507059e+37
    %v1116 = vand.u32 %v747, 2147483648
    %v1117 = vor.u32 1.1754944e-38, %v1116
    %v1118 = vsel %vm1115, %v1117, %v1113
    %v1119 = vmul.f32 1.0, %v1118
    %v1120 = vrcp.pop %v748
    %v1121 = vmul.f32 %v748, %v1120
    %v1122 = vsub.f32 1.0, %v1121
    %v1123 = vmul.f32 %v1120, %v1122
    %v1124 = vadd.f32 %v1120, %v1123
    %vm1125 = vweird.f32 %v748
    %vm1126 = vweird.f32 %v1120
    %vm1127 = vmor %vm1125, %vm1126
    %v1128 = vsel %vm1127, %v1120, %v1124
    %v1129 = vand.u32 2147483647, %v748
    %vm1130 = vcmp.eq.f32.partialorder %v1129, 8.507059e+37
    %v1131 = vand.u32 %v748, 2147483648
    %v1132 = vor.u32 1.1754944e-38, %v1131
    %v1133 = vsel %vm1130, %v1132, %v1128
    %v1134 = vmul.f32 1.0, %v1133
    %v1135 = vrcp.pop %v749
    %v1136 = vmul.f32 %v749, %v1135
    %v1137 = vsub.f32 1.0, %v1136
    %v1138 = vmul.f32 %v1135, %v1137
    %v1139 = vadd.f32 %v1135, %v1138
    %vm1140 = vweird.f32 %v749
    %vm1141 = vweird.f32 %v1135
    %vm1142 = vmor %vm1140, %vm1141
    %v1143 = vsel %vm1142, %v1135, %v1139
    %v1144 = vand.u32 2147483647, %v749
    %vm1145 = vcmp.eq.f32.partialorder %v1144, 8.507059e+37
    %v1146 = vand.u32 %v749, 2147483648
    %v1147 = vor.u32 1.1754944e-38, %v1146
    %v1148 = vsel %vm1145, %v1147, %v1143
    %v1149 = vmul.f32 1.0, %v1148
    %v1150 = vrcp.pop %v750
    %v1151 = vmul.f32 %v750, %v1150
    %v1152 = vsub.f32 1.0, %v1151
    %v1153 = vmul.f32 %v1150, %v1152
    %v1154 = vadd.f32 %v1150, %v1153
    %vm1155 = vweird.f32 %v750
    %vm1156 = vweird.f32 %v1150
    %vm1157 = vmor %vm1155, %vm1156
    %v1158 = vsel %vm1157, %v1150, %v1154
    %v1159 = vand.u32 2147483647, %v750
    %vm1160 = vcmp.eq.f32.partialorder %v1159, 8.507059e+37
    %v1161 = vand.u32 %v750, 2147483648
    %v1162 = vor.u32 1.1754944e-38, %v1161
    %v1163 = vsel %vm1160, %v1162, %v1158
    %v1164 = vmul.f32 1.0, %v1163
    %v1165 = vrcp.pop %v751
    %v1166 = vmul.f32 %v751, %v1165
    %v1167 = vsub.f32 1.0, %v1166
    %v1168 = vmul.f32 %v1165, %v1167
    %v1169 = vadd.f32 %v1165, %v1168
    %vm1170 = vweird.f32 %v751
    %vm1171 = vweird.f32 %v1165
    %vm1172 = vmor %vm1170, %vm1171
    %v1173 = vsel %vm1172, %v1165, %v1169
    %v1174 = vand.u32 2147483647, %v751
    %vm1175 = vcmp.eq.f32.partialorder %v1174, 8.507059e+37
    %v1176 = vand.u32 %v751, 2147483648
    %v1177 = vor.u32 1.1754944e-38, %v1176
    %v1178 = vsel %vm1175, %v1177, %v1173
    %v1179 = vmul.f32 1.0, %v1178
    %v1180 = vrcp.pop %v752
    %v1181 = vmul.f32 %v752, %v1180
    %v1182 = vsub.f32 1.0, %v1181
    %v1183 = vmul.f32 %v1180, %v1182
    %v1184 = vadd.f32 %v1180, %v1183
    %vm1185 = vweird.f32 %v752
    %vm1186 = vweird.f32 %v1180
    %vm1187 = vmor %vm1185, %vm1186
    %v1188 = vsel %vm1187, %v1180, %v1184
    %v1189 = vand.u32 2147483647, %v752
    %vm1190 = vcmp.eq.f32.partialorder %v1189, 8.507059e+37
    %v1191 = vand.u32 %v752, 2147483648
    %v1192 = vor.u32 1.1754944e-38, %v1191
    %v1193 = vsel %vm1190, %v1192, %v1188
    %v1194 = vmul.f32 1.0, %v1193
    %v1195 = vrcp.pop %v753
    %v1196 = vmul.f32 %v753, %v1195
    %v1197 = vsub.f32 1.0, %v1196
    %v1198 = vmul.f32 %v1195, %v1197
    %v1199 = vadd.f32 %v1195, %v1198
    %vm1200 = vweird.f32 %v753
    %vm1201 = vweird.f32 %v1195
    %vm1202 = vmor %vm1200, %vm1201
    %v1203 = vsel %vm1202, %v1195, %v1199
    %v1204 = vand.u32 2147483647, %v753
    %vm1205 = vcmp.eq.f32.partialorder %v1204, 8.507059e+37
    %v1206 = vand.u32 %v753, 2147483648
    %v1207 = vor.u32 1.1754944e-38, %v1206
    %v1208 = vsel %vm1205, %v1207, %v1203
    %v1209 = vmul.f32 1.0, %v1208
    %v1210 = vrcp.pop %v754
    %v1211 = vmul.f32 %v754, %v1210
    %v1212 = vsub.f32 1.0, %v1211
    %v1213 = vmul.f32 %v1210, %v1212
    %v1214 = vadd.f32 %v1210, %v1213
    %vm1215 = vweird.f32 %v754
    %vm1216 = vweird.f32 %v1210
    %vm1217 = vmor %vm1215, %vm1216
    %v1218 = vsel %vm1217, %v1210, %v1214
    %v1219 = vand.u32 2147483647, %v754
    %vm1220 = vcmp.eq.f32.partialorder %v1219, 8.507059e+37
    %v1221 = vand.u32 %v754, 2147483648
    %v1222 = vor.u32 1.1754944e-38, %v1221
    %v1223 = vsel %vm1220, %v1222, %v1218
    %v1224 = vmul.f32 1.0, %v1223
    %v1225 = vrcp.pop %v755
    %v1226 = vmul.f32 %v755, %v1225
    %v1227 = vsub.f32 1.0, %v1226
    %v1228 = vmul.f32 %v1225, %v1227
    %v1229 = vadd.f32 %v1225, %v1228
    %vm1230 = vweird.f32 %v755
    %vm1231 = vweird.f32 %v1225
    %vm1232 = vmor %vm1230, %vm1231
    %v1233 = vsel %vm1232, %v1225, %v1229
    %v1234 = vand.u32 2147483647, %v755
    %vm1235 = vcmp.eq.f32.partialorder %v1234, 8.507059e+37
    %v1236 = vand.u32 %v755, 2147483648
    %v1237 = vor.u32 1.1754944e-38, %v1236
    %v1238 = vsel %vm1235, %v1237, %v1233
    %v1239 = vmul.f32 1.0, %v1238
    %v1240 = vrcp.pop %v756
    %v1241 = vmul.f32 %v756, %v1240
    %v1242 = vsub.f32 1.0, %v1241
    %v1243 = vmul.f32 %v1240, %v1242
    %v1244 = vadd.f32 %v1240, %v1243
    %vm1245 = vweird.f32 %v756
    %vm1246 = vweird.f32 %v1240
    %vm1247 = vmor %vm1245, %vm1246
    %v1248 = vsel %vm1247, %v1240, %v1244
    %v1249 = vand.u32 2147483647, %v756
    %vm1250 = vcmp.eq.f32.partialorder %v1249, 8.507059e+37
    %v1251 = vand.u32 %v756, 2147483648
    %v1252 = vor.u32 1.1754944e-38, %v1251
    %v1253 = vsel %vm1250, %v1252, %v1248
    %v1254 = vmul.f32 1.0, %v1253
    %v1255 = vrcp.pop %v757
    %v1256 = vmul.f32 %v757, %v1255
    %v1257 = vsub.f32 1.0, %v1256
    %v1258 = vmul.f32 %v1255, %v1257
    %v1259 = vadd.f32 %v1255, %v1258
    %vm1260 = vweird.f32 %v757
    %vm1261 = vweird.f32 %v1255
    %vm1262 = vmor %vm1260, %vm1261
    %v1263 = vsel %vm1262, %v1255, %v1259
    %v1264 = vand.u32 2147483647, %v757
    %vm1265 = vcmp.eq.f32.partialorder %v1264, 8.507059e+37
    %v1266 = vand.u32 %v757, 2147483648
    %v1267 = vor.u32 1.1754944e-38, %v1266
    %v1268 = vsel %vm1265, %v1267, %v1263
    %v1269 = vmul.f32 1.0, %v1268
    %v1270 = vrcp.pop %v758
    %v1271 = vmul.f32 %v758, %v1270
    %v1272 = vsub.f32 1.0, %v1271
    %v1273 = vmul.f32 %v1270, %v1272
    %v1274 = vadd.f32 %v1270, %v1273
    %vm1275 = vweird.f32 %v758
    %vm1276 = vweird.f32 %v1270
    %vm1277 = vmor %vm1275, %vm1276
    %v1278 = vsel %vm1277, %v1270, %v1274
    %v1279 = vand.u32 2147483647, %v758
    %vm1280 = vcmp.eq.f32.partialorder %v1279, 8.507059e+37
    %v1281 = vand.u32 %v758, 2147483648
    %v1282 = vor.u32 1.1754944e-38, %v1281
    %v1283 = vsel %vm1280, %v1282, %v1278
    %v1284 = vmul.f32 1.0, %v1283
    %v1285 = vrcp.pop %v759
    %v1286 = vmul.f32 %v759, %v1285
    %v1287 = vsub.f32 1.0, %v1286
    %v1288 = vmul.f32 %v1285, %v1287
    %v1289 = vadd.f32 %v1285, %v1288
    %vm1290 = vweird.f32 %v759
    %vm1291 = vweird.f32 %v1285
    %vm1292 = vmor %vm1290, %vm1291
    %v1293 = vsel %vm1292, %v1285, %v1289
    %v1294 = vand.u32 2147483647, %v759
    %vm1295 = vcmp.eq.f32.partialorder %v1294, 8.507059e+37
    %v1296 = vand.u32 %v759, 2147483648
    %v1297 = vor.u32 1.1754944e-38, %v1296
    %v1298 = vsel %vm1295, %v1297, %v1293
    %v1299 = vmul.f32 1.0, %v1298
    %v1300 = vrcp.pop %v760
    %v1301 = vmul.f32 %v760, %v1300
    %v1302 = vsub.f32 1.0, %v1301
    %v1303 = vmul.f32 %v1300, %v1302
    %v1304 = vadd.f32 %v1300, %v1303
    %vm1305 = vweird.f32 %v760
    %vm1306 = vweird.f32 %v1300
    %vm1307 = vmor %vm1305, %vm1306
    %v1308 = vsel %vm1307, %v1300, %v1304
    %v1309 = vand.u32 2147483647, %v760
    %vm1310 = vcmp.eq.f32.partialorder %v1309, 8.507059e+37
    %v1311 = vand.u32 %v760, 2147483648
    %v1312 = vor.u32 1.1754944e-38, %v1311
    %v1313 = vsel %vm1310, %v1312, %v1308
    %v1314 = vmul.f32 1.0, %v1313
    %v1315 = vrcp.pop %v761
    %v1316 = vmul.f32 %v761, %v1315
    %v1317 = vsub.f32 1.0, %v1316
    %v1318 = vmul.f32 %v1315, %v1317
    %v1319 = vadd.f32 %v1315, %v1318
    %vm1320 = vweird.f32 %v761
    %vm1321 = vweird.f32 %v1315
    %vm1322 = vmor %vm1320, %vm1321
    %v1323 = vsel %vm1322, %v1315, %v1319
    %v1324 = vand.u32 2147483647, %v761
    %vm1325 = vcmp.eq.f32.partialorder %v1324, 8.507059e+37
    %v1326 = vand.u32 %v761, 2147483648
    %v1327 = vor.u32 1.1754944e-38, %v1326
    %v1328 = vsel %vm1325, %v1327, %v1323
    %v1329 = vmul.f32 1.0, %v1328
    %v1330 = vrcp.pop %v762
    %v1331 = vmul.f32 %v762, %v1330
    %v1332 = vsub.f32 1.0, %v1331
    %v1333 = vmul.f32 %v1330, %v1332
    %v1334 = vadd.f32 %v1330, %v1333
    %vm1335 = vweird.f32 %v762
    %vm1336 = vweird.f32 %v1330
    %vm1337 = vmor %vm1335, %vm1336
    %v1338 = vsel %vm1337, %v1330, %v1334
    %v1339 = vand.u32 2147483647, %v762
    %vm1340 = vcmp.eq.f32.partialorder %v1339, 8.507059e+37
    %v1341 = vand.u32 %v762, 2147483648
    %v1342 = vor.u32 1.1754944e-38, %v1341
    %v1343 = vsel %vm1340, %v1342, %v1338
    %v1344 = vmul.f32 1.0, %v1343
    %v1345 = vrcp.pop %v763
    %v1346 = vmul.f32 %v763, %v1345
    %v1347 = vsub.f32 1.0, %v1346
    %v1348 = vmul.f32 %v1345, %v1347
    %v1349 = vadd.f32 %v1345, %v1348
    %vm1350 = vweird.f32 %v763
    %vm1351 = vweird.f32 %v1345
    %vm1352 = vmor %vm1350, %vm1351
    %v1353 = vsel %vm1352, %v1345, %v1349
    %v1354 = vand.u32 2147483647, %v763
    %vm1355 = vcmp.eq.f32.partialorder %v1354, 8.507059e+37
    %v1356 = vand.u32 %v763, 2147483648
    %v1357 = vor.u32 1.1754944e-38, %v1356
    %v1358 = vsel %vm1355, %v1357, %v1353
    %v1359 = vmul.f32 1.0, %v1358
    %v1360 = vrcp.pop %v764
    %v1361 = vmul.f32 %v764, %v1360
    %v1362 = vsub.f32 1.0, %v1361
    %v1363 = vmul.f32 %v1360, %v1362
    %v1364 = vadd.f32 %v1360, %v1363
    %vm1365 = vweird.f32 %v764
    %vm1366 = vweird.f32 %v1360
    %vm1367 = vmor %vm1365, %vm1366
    %v1368 = vsel %vm1367, %v1360, %v1364
    %v1369 = vand.u32 2147483647, %v764
    %vm1370 = vcmp.eq.f32.partialorder %v1369, 8.507059e+37
    %v1371 = vand.u32 %v764, 2147483648
    %v1372 = vor.u32 1.1754944e-38, %v1371
    %v1373 = vsel %vm1370, %v1372, %v1368
    %v1374 = vmul.f32 1.0, %v1373
    %v1375 = vrcp.pop %v765
    %v1376 = vmul.f32 %v765, %v1375
    %v1377 = vsub.f32 1.0, %v1376
    %v1378 = vmul.f32 %v1375, %v1377
    %v1379 = vadd.f32 %v1375, %v1378
    %vm1380 = vweird.f32 %v765
    %vm1381 = vweird.f32 %v1375
    %vm1382 = vmor %vm1380, %vm1381
    %v1383 = vsel %vm1382, %v1375, %v1379
    %v1384 = vand.u32 2147483647, %v765
    %vm1385 = vcmp.eq.f32.partialorder %v1384, 8.507059e+37
    %v1386 = vand.u32 %v765, 2147483648
    %v1387 = vor.u32 1.1754944e-38, %v1386
    %v1388 = vsel %vm1385, %v1387, %v1383
    %v1389 = vmul.f32 1.0, %v1388
    %v1390 = vrcp.pop %v766
    %v1391 = vmul.f32 %v766, %v1390
    %v1392 = vsub.f32 1.0, %v1391
    %v1393 = vmul.f32 %v1390, %v1392
    %v1394 = vadd.f32 %v1390, %v1393
    %vm1395 = vweird.f32 %v766
    %vm1396 = vweird.f32 %v1390
    %vm1397 = vmor %vm1395, %vm1396
    %v1398 = vsel %vm1397, %v1390, %v1394
    %v1399 = vand.u32 2147483647, %v766
    %vm1400 = vcmp.eq.f32.partialorder %v1399, 8.507059e+37
    %v1401 = vand.u32 %v766, 2147483648
    %v1402 = vor.u32 1.1754944e-38, %v1401
    %v1403 = vsel %vm1400, %v1402, %v1398
    %v1404 = vmul.f32 1.0, %v1403
    %v1405 = vrcp.pop %v767
    %v1406 = vmul.f32 %v767, %v1405
    %v1407 = vsub.f32 1.0, %v1406
    %v1408 = vmul.f32 %v1405, %v1407
    %v1409 = vadd.f32 %v1405, %v1408
    %vm1410 = vweird.f32 %v767
    %vm1411 = vweird.f32 %v1405
    %vm1412 = vmor %vm1410, %vm1411
    %v1413 = vsel %vm1412, %v1405, %v1409
    %v1414 = vand.u32 2147483647, %v767
    %vm1415 = vcmp.eq.f32.partialorder %v1414, 8.507059e+37
    %v1416 = vand.u32 %v767, 2147483648
    %v1417 = vor.u32 1.1754944e-38, %v1416
    %v1418 = vsel %vm1415, %v1417, %v1413
    %v1419 = vmul.f32 1.0, %v1418
    %v1420 = vrcp.pop %v768
    %v1421 = vmul.f32 %v768, %v1420
    %v1422 = vsub.f32 1.0, %v1421
    %v1423 = vmul.f32 %v1420, %v1422
    %v1424 = vadd.f32 %v1420, %v1423
    %vm1425 = vweird.f32 %v768
    %vm1426 = vweird.f32 %v1420
    %vm1427 = vmor %vm1425, %vm1426
    %v1428 = vsel %vm1427, %v1420, %v1424
    %v1429 = vand.u32 2147483647, %v768
    %vm1430 = vcmp.eq.f32.partialorder %v1429, 8.507059e+37
    %v1431 = vand.u32 %v768, 2147483648
    %v1432 = vor.u32 1.1754944e-38, %v1431
    %v1433 = vsel %vm1430, %v1432, %v1428
    %v1434 = vmul.f32 1.0, %v1433
    %v1435 = vrcp.pop %v769
    %v1436 = vmul.f32 %v769, %v1435
    %v1437 = vsub.f32 1.0, %v1436
    %v1438 = vmul.f32 %v1435, %v1437
    %v1439 = vadd.f32 %v1435, %v1438
    %vm1440 = vweird.f32 %v769
    %vm1441 = vweird.f32 %v1435
    %vm1442 = vmor %vm1440, %vm1441
    %v1443 = vsel %vm1442, %v1435, %v1439
    %v1444 = vand.u32 2147483647, %v769
    %vm1445 = vcmp.eq.f32.partialorder %v1444, 8.507059e+37
    %v1446 = vand.u32 %v769, 2147483648
    %v1447 = vor.u32 1.1754944e-38, %v1446
    %v1448 = vsel %vm1445, %v1447, %v1443
    %v1449 = vmul.f32 1.0, %v1448
    %v1450 = vrcp.pop %v770
    %v1451 = vmul.f32 %v770, %v1450
    %v1452 = vsub.f32 1.0, %v1451
    %v1453 = vmul.f32 %v1450, %v1452
    %v1454 = vadd.f32 %v1450, %v1453
    %vm1455 = vweird.f32 %v770
    %vm1456 = vweird.f32 %v1450
    %vm1457 = vmor %vm1455, %vm1456
    %v1458 = vsel %vm1457, %v1450, %v1454
    %v1459 = vand.u32 2147483647, %v770
    %vm1460 = vcmp.eq.f32.partialorder %v1459, 8.507059e+37
    %v1461 = vand.u32 %v770, 2147483648
    %v1462 = vor.u32 1.1754944e-38, %v1461
    %v1463 = vsel %vm1460, %v1462, %v1458
    %v1464 = vmul.f32 1.0, %v1463
    %v1465 = vrcp.pop %v771
    %v1466 = vmul.f32 %v771, %v1465
    %v1467 = vsub.f32 1.0, %v1466
    %v1468 = vmul.f32 %v1465, %v1467
    %v1469 = vadd.f32 %v1465, %v1468
    %vm1470 = vweird.f32 %v771
    %vm1471 = vweird.f32 %v1465
    %vm1472 = vmor %vm1470, %vm1471
    %v1473 = vsel %vm1472, %v1465, %v1469
    %v1474 = vand.u32 2147483647, %v771
    %vm1475 = vcmp.eq.f32.partialorder %v1474, 8.507059e+37
    %v1476 = vand.u32 %v771, 2147483648
    %v1477 = vor.u32 1.1754944e-38, %v1476
    %v1478 = vsel %vm1475, %v1477, %v1473
    %v1479 = vmul.f32 1.0, %v1478
    %v1480 = vrcp.pop %v772
    %v1481 = vmul.f32 %v772, %v1480
    %v1482 = vsub.f32 1.0, %v1481
    %v1483 = vmul.f32 %v1480, %v1482
    %v1484 = vadd.f32 %v1480, %v1483
    %vm1485 = vweird.f32 %v772
    %vm1486 = vweird.f32 %v1480
    %vm1487 = vmor %vm1485, %vm1486
    %v1488 = vsel %vm1487, %v1480, %v1484
    %v1489 = vand.u32 2147483647, %v772
    %vm1490 = vcmp.eq.f32.partialorder %v1489, 8.507059e+37
    %v1491 = vand.u32 %v772, 2147483648
    %v1492 = vor.u32 1.1754944e-38, %v1491
    %v1493 = vsel %vm1490, %v1492, %v1488
    %v1494 = vmul.f32 1.0, %v1493
    %v1495 = vrcp.pop %v773
    %v1496 = vmul.f32 %v773, %v1495
    %v1497 = vsub.f32 1.0, %v1496
    %v1498 = vmul.f32 %v1495, %v1497
    %v1499 = vadd.f32 %v1495, %v1498
    %vm1500 = vweird.f32 %v773
    %vm1501 = vweird.f32 %v1495
    %vm1502 = vmor %vm1500, %vm1501
    %v1503 = vsel %vm1502, %v1495, %v1499
    %v1504 = vand.u32 2147483647, %v773
    %vm1505 = vcmp.eq.f32.partialorder %v1504, 8.507059e+37
    %v1506 = vand.u32 %v773, 2147483648
    %v1507 = vor.u32 1.1754944e-38, %v1506
    %v1508 = vsel %vm1505, %v1507, %v1503
    %v1509 = vmul.f32 1.0, %v1508
    %v1510 = vrcp.pop %v774
    %v1511 = vmul.f32 %v774, %v1510
    %v1512 = vsub.f32 1.0, %v1511
    %v1513 = vmul.f32 %v1510, %v1512
    %v1514 = vadd.f32 %v1510, %v1513
    %vm1515 = vweird.f32 %v774
    %vm1516 = vweird.f32 %v1510
    %vm1517 = vmor %vm1515, %vm1516
    %v1518 = vsel %vm1517, %v1510, %v1514
    %v1519 = vand.u32 2147483647, %v774
    %vm1520 = vcmp.eq.f32.partialorder %v1519, 8.507059e+37
    %v1521 = vand.u32 %v774, 2147483648
    %v1522 = vor.u32 1.1754944e-38, %v1521
    %v1523 = vsel %vm1520, %v1522, %v1518
    %v1524 = vmul.f32 1.0, %v1523
    %v1525 = vrcp.pop %v775
    %v1526 = vmul.f32 %v775, %v1525
    %v1527 = vsub.f32 1.0, %v1526
    %v1528 = vmul.f32 %v1525, %v1527
    %v1529 = vadd.f32 %v1525, %v1528
    %vm1530 = vweird.f32 %v775
    %vm1531 = vweird.f32 %v1525
    %vm1532 = vmor %vm1530, %vm1531
    %v1533 = vsel %vm1532, %v1525, %v1529
    %v1534 = vand.u32 2147483647, %v775
    %vm1535 = vcmp.eq.f32.partialorder %v1534, 8.507059e+37
    %v1536 = vand.u32 %v775, 2147483648
    %v1537 = vor.u32 1.1754944e-38, %v1536
    %v1538 = vsel %vm1535, %v1537, %v1533
    %v1539 = vmul.f32 1.0, %v1538
    %v1540 = vrcp.pop %v776
    %v1541 = vmul.f32 %v776, %v1540
    %v1542 = vsub.f32 1.0, %v1541
    %v1543 = vmul.f32 %v1540, %v1542
    %v1544 = vadd.f32 %v1540, %v1543
    %vm1545 = vweird.f32 %v776
    %vm1546 = vweird.f32 %v1540
    %vm1547 = vmor %vm1545, %vm1546
    %v1548 = vsel %vm1547, %v1540, %v1544
    %v1549 = vand.u32 2147483647, %v776
    %vm1550 = vcmp.eq.f32.partialorder %v1549, 8.507059e+37
    %v1551 = vand.u32 %v776, 2147483648
    %v1552 = vor.u32 1.1754944e-38, %v1551
    %v1553 = vsel %vm1550, %v1552, %v1548
    %v1554 = vmul.f32 1.0, %v1553
    %v1555 = vrcp.pop %v777
    %v1556 = vmul.f32 %v777, %v1555
    %v1557 = vsub.f32 1.0, %v1556
    %v1558 = vmul.f32 %v1555, %v1557
    %v1559 = vadd.f32 %v1555, %v1558
    %vm1560 = vweird.f32 %v777
    %vm1561 = vweird.f32 %v1555
    %vm1562 = vmor %vm1560, %vm1561
    %v1563 = vsel %vm1562, %v1555, %v1559
    %v1564 = vand.u32 2147483647, %v777
    %vm1565 = vcmp.eq.f32.partialorder %v1564, 8.507059e+37
    %v1566 = vand.u32 %v777, 2147483648
    %v1567 = vor.u32 1.1754944e-38, %v1566
    %v1568 = vsel %vm1565, %v1567, %v1563
    %v1569 = vmul.f32 1.0, %v1568
    %v1570 = vrcp.pop %v778
    %v1571 = vmul.f32 %v778, %v1570
    %v1572 = vsub.f32 1.0, %v1571
    %v1573 = vmul.f32 %v1570, %v1572
    %v1574 = vadd.f32 %v1570, %v1573
    %vm1575 = vweird.f32 %v778
    %vm1576 = vweird.f32 %v1570
    %vm1577 = vmor %vm1575, %vm1576
    %v1578 = vsel %vm1577, %v1570, %v1574
    %v1579 = vand.u32 2147483647, %v778
    %vm1580 = vcmp.eq.f32.partialorder %v1579, 8.507059e+37
    %v1581 = vand.u32 %v778, 2147483648
    %v1582 = vor.u32 1.1754944e-38, %v1581
    %v1583 = vsel %vm1580, %v1582, %v1578
    %v1584 = vmul.f32 1.0, %v1583
    %v1585 = vrcp.pop %v779
    %v1586 = vmul.f32 %v779, %v1585
    %v1587 = vsub.f32 1.0, %v1586
    %v1588 = vmul.f32 %v1585, %v1587
    %v1589 = vadd.f32 %v1585, %v1588
    %vm1590 = vweird.f32 %v779
    %vm1591 = vweird.f32 %v1585
    %vm1592 = vmor %vm1590, %vm1591
    %v1593 = vsel %vm1592, %v1585, %v1589
    %v1594 = vand.u32 2147483647, %v779
    %vm1595 = vcmp.eq.f32.partialorder %v1594, 8.507059e+37
    %v1596 = vand.u32 %v779, 2147483648
    %v1597 = vor.u32 1.1754944e-38, %v1596
    %v1598 = vsel %vm1595, %v1597, %v1593
    %v1599 = vmul.f32 1.0, %v1598
    %v1600 = vrcp.pop %v780
    %v1601 = vmul.f32 %v780, %v1600
    %v1602 = vsub.f32 1.0, %v1601
    %v1603 = vmul.f32 %v1600, %v1602
    %v1604 = vadd.f32 %v1600, %v1603
    %vm1605 = vweird.f32 %v780
    %vm1606 = vweird.f32 %v1600
    %vm1607 = vmor %vm1605, %vm1606
    %v1608 = vsel %vm1607, %v1600, %v1604
    %v1609 = vand.u32 2147483647, %v780
    %vm1610 = vcmp.eq.f32.partialorder %v1609, 8.507059e+37
    %v1611 = vand.u32 %v780, 2147483648
    %v1612 = vor.u32 1.1754944e-38, %v1611
    %v1613 = vsel %vm1610, %v1612, %v1608
    %v1614 = vmul.f32 1.0, %v1613
    %v1615 = vrcp.pop %v781
    %v1616 = vmul.f32 %v781, %v1615
    %v1617 = vsub.f32 1.0, %v1616
    %v1618 = vmul.f32 %v1615, %v1617
    %v1619 = vadd.f32 %v1615, %v1618
    %vm1620 = vweird.f32 %v781
    %vm1621 = vweird.f32 %v1615
    %vm1622 = vmor %vm1620, %vm1621
    %v1623 = vsel %vm1622, %v1615, %v1619
    %v1624 = vand.u32 2147483647, %v781
    %vm1625 = vcmp.eq.f32.partialorder %v1624, 8.507059e+37
    %v1626 = vand.u32 %v781, 2147483648
    %v1627 = vor.u32 1.1754944e-38, %v1626
    %v1628 = vsel %vm1625, %v1627, %v1623
    %v1629 = vmul.f32 1.0, %v1628
    %v1630 = vrcp.pop %v782
    %v1631 = vmul.f32 %v782, %v1630
    %v1632 = vsub.f32 1.0, %v1631
    %v1633 = vmul.f32 %v1630, %v1632
    %v1634 = vadd.f32 %v1630, %v1633
    %vm1635 = vweird.f32 %v782
    %vm1636 = vweird.f32 %v1630
    %vm1637 = vmor %vm1635, %vm1636
    %v1638 = vsel %vm1637, %v1630, %v1634
    %v1639 = vand.u32 2147483647, %v782
    %vm1640 = vcmp.eq.f32.partialorder %v1639, 8.507059e+37
    %v1641 = vand.u32 %v782, 2147483648
    %v1642 = vor.u32 1.1754944e-38, %v1641
    %v1643 = vsel %vm1640, %v1642, %v1638
    %v1644 = vmul.f32 1.0, %v1643
    %v1645 = vrcp.pop %v783
    %v1646 = vmul.f32 %v783, %v1645
    %v1647 = vsub.f32 1.0, %v1646
    %v1648 = vmul.f32 %v1645, %v1647
    %v1649 = vadd.f32 %v1645, %v1648
    %vm1650 = vweird.f32 %v783
    %vm1651 = vweird.f32 %v1645
    %vm1652 = vmor %vm1650, %vm1651
    %v1653 = vsel %vm1652, %v1645, %v1649
    %v1654 = vand.u32 2147483647, %v783
    %vm1655 = vcmp.eq.f32.partialorder %v1654, 8.507059e+37
    %v1656 = vand.u32 %v783, 2147483648
    %v1657 = vor.u32 1.1754944e-38, %v1656
    %v1658 = vsel %vm1655, %v1657, %v1653
    %v1659 = vmul.f32 1.0, %v1658
    %v1660 = vrcp.pop %v784
    %v1661 = vmul.f32 %v784, %v1660
    %v1662 = vsub.f32 1.0, %v1661
    %v1663 = vmul.f32 %v1660, %v1662
    %v1664 = vadd.f32 %v1660, %v1663
    %vm1665 = vweird.f32 %v784
    %vm1666 = vweird.f32 %v1660
    %vm1667 = vmor %vm1665, %vm1666
    %v1668 = vsel %vm1667, %v1660, %v1664
    %v1669 = vand.u32 2147483647, %v784
    %vm1670 = vcmp.eq.f32.partialorder %v1669, 8.507059e+37
    %v1671 = vand.u32 %v784, 2147483648
    %v1672 = vor.u32 1.1754944e-38, %v1671
    %v1673 = vsel %vm1670, %v1672, %v1668
    %v1674 = vmul.f32 1.0, %v1673
    %v1675 = vrcp.pop %v785
    %v1676 = vmul.f32 %v785, %v1675
    %v1677 = vsub.f32 1.0, %v1676
    %v1678 = vmul.f32 %v1675, %v1677
    %v1679 = vadd.f32 %v1675, %v1678
    %vm1680 = vweird.f32 %v785
    %vm1681 = vweird.f32 %v1675
    %vm1682 = vmor %vm1680, %vm1681
    %v1683 = vsel %vm1682, %v1675, %v1679
    %v1684 = vand.u32 2147483647, %v785
    %vm1685 = vcmp.eq.f32.partialorder %v1684, 8.507059e+37
    %v1686 = vand.u32 %v785, 2147483648
    %v1687 = vor.u32 1.1754944e-38, %v1686
    %v1688 = vsel %vm1685, %v1687, %v1683
    %v1689 = vmul.f32 1.0, %v1688
    %v1690 = vrcp.pop %v786
    %v1691 = vmul.f32 %v786, %v1690
    %v1692 = vsub.f32 1.0, %v1691
    %v1693 = vmul.f32 %v1690, %v1692
    %v1694 = vadd.f32 %v1690, %v1693
    %vm1695 = vweird.f32 %v786
    %vm1696 = vweird.f32 %v1690
    %vm1697 = vmor %vm1695, %vm1696
    %v1698 = vsel %vm1697, %v1690, %v1694
    %v1699 = vand.u32 2147483647, %v786
    %vm1700 = vcmp.eq.f32.partialorder %v1699, 8.507059e+37
    %v1701 = vand.u32 %v786, 2147483648
    %v1702 = vor.u32 1.1754944e-38, %v1701
    %v1703 = vsel %vm1700, %v1702, %v1698
    %v1704 = vmul.f32 1.0, %v1703
    %v1705 = vrcp.pop %v787
    %v1706 = vmul.f32 %v787, %v1705
    %v1707 = vsub.f32 1.0, %v1706
    %v1708 = vmul.f32 %v1705, %v1707
    %v1709 = vadd.f32 %v1705, %v1708
    %vm1710 = vweird.f32 %v787
    %vm1711 = vweird.f32 %v1705
    %vm1712 = vmor %vm1710, %vm1711
    %v1713 = vsel %vm1712, %v1705, %v1709
    %v1714 = vand.u32 2147483647, %v787
    %vm1715 = vcmp.eq.f32.partialorder %v1714, 8.507059e+37
    %v1716 = vand.u32 %v787, 2147483648
    %v1717 = vor.u32 1.1754944e-38, %v1716
    %v1718 = vsel %vm1715, %v1717, %v1713
    %v1719 = vmul.f32 1.0, %v1718
    %v1720 = vrcp.pop %v788
    %v1721 = vmul.f32 %v788, %v1720
    %v1722 = vsub.f32 1.0, %v1721
    %v1723 = vmul.f32 %v1720, %v1722
    %v1724 = vadd.f32 %v1720, %v1723
    %vm1725 = vweird.f32 %v788
    %vm1726 = vweird.f32 %v1720
    %vm1727 = vmor %vm1725, %vm1726
    %v1728 = vsel %vm1727, %v1720, %v1724
    %v1729 = vand.u32 2147483647, %v788
    %vm1730 = vcmp.eq.f32.partialorder %v1729, 8.507059e+37
    %v1731 = vand.u32 %v788, 2147483648
    %v1732 = vor.u32 1.1754944e-38, %v1731
    %v1733 = vsel %vm1730, %v1732, %v1728
    %v1734 = vmul.f32 1.0, %v1733
    %v1735 = vrcp.pop %v789
    %v1736 = vmul.f32 %v789, %v1735
    %v1737 = vsub.f32 1.0, %v1736
    %v1738 = vmul.f32 %v1735, %v1737
    %v1739 = vadd.f32 %v1735, %v1738
    %vm1740 = vweird.f32 %v789
    %vm1741 = vweird.f32 %v1735
    %vm1742 = vmor %vm1740, %vm1741
    %v1743 = vsel %vm1742, %v1735, %v1739
    %v1744 = vand.u32 2147483647, %v789
    %vm1745 = vcmp.eq.f32.partialorder %v1744, 8.507059e+37
    %v1746 = vand.u32 %v789, 2147483648
    %v1747 = vor.u32 1.1754944e-38, %v1746
    %v1748 = vsel %vm1745, %v1747, %v1743
    %v1749 = vmul.f32 1.0, %v1748
    %v1750 = vmul.f32 %v375, %v804
    %v1751 = vmul.f32 %v377, %v819
    %v1752 = vmul.f32 %v380, %v834
    %v1753 = vmul.f32 %v382, %v849
    %v1754 = vmul.f32 %v385, %v864
    %v1755 = vmul.f32 %v387, %v879
    %v1756 = vmul.f32 %v390, %v894
    %v1757 = vmul.f32 %v392, %v909
    %v1758 = vmul.f32 %v395, %v924
    %v1759 = vmul.f32 %v397, %v939
    %v1760 = vmul.f32 %v400, %v954
    %v1761 = vmul.f32 %v402, %v969
    %v1762 = vmul.f32 %v405, %v984
    %v1763 = vmul.f32 %v407, %v999
    %v1764 = vmul.f32 %v410, %v1014
    %v1765 = vmul.f32 %v412, %v1029
    %v1766 = vmul.f32 %v415, %v1044
    %v1767 = vmul.f32 %v417, %v1059
    %v1768 = vmul.f32 %v420, %v1074
    %v1769 = vmul.f32 %v422, %v1089
    %v1770 = vmul.f32 %v425, %v1104
    %v1771 = vmul.f32 %v427, %v1119
    %v1772 = vmul.f32 %v430, %v1134
    %v1773 = vmul.f32 %v432, %v1149
    %v1774 = vmul.f32 %v435, %v1164
    %v1775 = vmul.f32 %v437, %v1179
    %v1776 = vmul.f32 %v440, %v1194
    %v1777 = vmul.f32 %v442, %v1209
    %v1778 = vmul.f32 %v445, %v1224
    %v1779 = vmul.f32 %v447, %v1239
    %v1780 = vmul.f32 %v450, %v1254
    %v1781 = vmul.f32 %v452, %v1269
    %v1782 = vmul.f32 %v455, %v1284
    %v1783 = vmul.f32 %v457, %v1299
    %v1784 = vmul.f32 %v460, %v1314
    %v1785 = vmul.f32 %v462, %v1329
    %v1786 = vmul.f32 %v465, %v1344
    %v1787 = vmul.f32 %v467, %v1359
    %v1788 = vmul.f32 %v470, %v1374
    %v1789 = vmul.f32 %v472, %v1389
    %v1790 = vmul.f32 %v475, %v1404
    %v1791 = vmul.f32 %v477, %v1419
    %v1792 = vmul.f32 %v480, %v1434
    %v1793 = vmul.f32 %v482, %v1449
    %v1794 = vmul.f32 %v485, %v1464
    %v1795 = vmul.f32 %v487, %v1479
    %v1796 = vmul.f32 %v490, %v1494
    %v1797 = vmul.f32 %v492, %v1509
    %v1798 = vmul.f32 %v495, %v1524
    %v1799 = vmul.f32 %v497, %v1539
    %v1800 = vmul.f32 %v500, %v1554
    %v1801 = vmul.f32 %v502, %v1569
    %v1802 = vmul.f32 %v505, %v1584
    %v1803 = vmul.f32 %v507, %v1599
    %v1804 = vmul.f32 %v510, %v1614
    %v1805 = vmul.f32 %v512, %v1629
    %v1806 = vmul.f32 %v515, %v1644
    %v1807 = vmul.f32 %v517, %v1659
    %v1808 = vmul.f32 %v520, %v1674
    %v1809 = vmul.f32 %v522, %v1689
    %v1810 = vmul.f32 %v525, %v1704
    %v1811 = vmul.f32 %v527, %v1719
    %v1812 = vmul.f32 %v530, %v1734
    %v1813 = vmul.f32 %v532, %v1749
    %v1814 = vpack.c.bf16 %v1750, %v1750
    %v1815 = vpack.c.bf16 %v1751, %v1751
    %v1816 = vpack.c.bf16 %v1752, %v1752
    %v1817 = vpack.c.bf16 %v1753, %v1753
    %v1818 = vpack.c.bf16 %v1754, %v1754
    %v1819 = vpack.c.bf16 %v1755, %v1755
    %v1820 = vpack.c.bf16 %v1756, %v1756
    %v1821 = vpack.c.bf16 %v1757, %v1757
    %v1822 = vpack.c.bf16 %v1758, %v1758
    %v1823 = vpack.c.bf16 %v1759, %v1759
    %v1824 = vpack.c.bf16 %v1760, %v1760
    %v1825 = vpack.c.bf16 %v1761, %v1761
    %v1826 = vpack.c.bf16 %v1762, %v1762
    %v1827 = vpack.c.bf16 %v1763, %v1763
    %v1828 = vpack.c.bf16 %v1764, %v1764
    %v1829 = vpack.c.bf16 %v1765, %v1765
    %v1830 = vpack.c.bf16 %v1766, %v1766
    %v1831 = vpack.c.bf16 %v1767, %v1767
    %v1832 = vpack.c.bf16 %v1768, %v1768
    %v1833 = vpack.c.bf16 %v1769, %v1769
    %v1834 = vpack.c.bf16 %v1770, %v1770
    %v1835 = vpack.c.bf16 %v1771, %v1771
    %v1836 = vpack.c.bf16 %v1772, %v1772
    %v1837 = vpack.c.bf16 %v1773, %v1773
    %v1838 = vpack.c.bf16 %v1774, %v1774
    %v1839 = vpack.c.bf16 %v1775, %v1775
    %v1840 = vpack.c.bf16 %v1776, %v1776
    %v1841 = vpack.c.bf16 %v1777, %v1777
    %v1842 = vpack.c.bf16 %v1778, %v1778
    %v1843 = vpack.c.bf16 %v1779, %v1779
    %v1844 = vpack.c.bf16 %v1780, %v1780
    %v1845 = vpack.c.bf16 %v1781, %v1781
    %v1846 = vpack.c.bf16 %v1782, %v1782
    %v1847 = vpack.c.bf16 %v1783, %v1783
    %v1848 = vpack.c.bf16 %v1784, %v1784
    %v1849 = vpack.c.bf16 %v1785, %v1785
    %v1850 = vpack.c.bf16 %v1786, %v1786
    %v1851 = vpack.c.bf16 %v1787, %v1787
    %v1852 = vpack.c.bf16 %v1788, %v1788
    %v1853 = vpack.c.bf16 %v1789, %v1789
    %v1854 = vpack.c.bf16 %v1790, %v1790
    %v1855 = vpack.c.bf16 %v1791, %v1791
    %v1856 = vpack.c.bf16 %v1792, %v1792
    %v1857 = vpack.c.bf16 %v1793, %v1793
    %v1858 = vpack.c.bf16 %v1794, %v1794
    %v1859 = vpack.c.bf16 %v1795, %v1795
    %v1860 = vpack.c.bf16 %v1796, %v1796
    %v1861 = vpack.c.bf16 %v1797, %v1797
    %v1862 = vpack.c.bf16 %v1798, %v1798
    %v1863 = vpack.c.bf16 %v1799, %v1799
    %v1864 = vpack.c.bf16 %v1800, %v1800
    %v1865 = vpack.c.bf16 %v1801, %v1801
    %v1866 = vpack.c.bf16 %v1802, %v1802
    %v1867 = vpack.c.bf16 %v1803, %v1803
    %v1868 = vpack.c.bf16 %v1804, %v1804
    %v1869 = vpack.c.bf16 %v1805, %v1805
    %v1870 = vpack.c.bf16 %v1806, %v1806
    %v1871 = vpack.c.bf16 %v1807, %v1807
    %v1872 = vpack.c.bf16 %v1808, %v1808
    %v1873 = vpack.c.bf16 %v1809, %v1809
    %v1874 = vpack.c.bf16 %v1810, %v1810
    %v1875 = vpack.c.bf16 %v1811, %v1811
    %v1876 = vpack.c.bf16 %v1812, %v1812
    %v1877 = vpack.c.bf16 %v1813, %v1813
    %1878 = vst [vmem:[#allocation2] sm:$0xf] %v1814
    %1879 = vst [vmem:[#allocation2 + $0x4] sm:$0xf] %v1815
    %1880 = vst [vmem:[#allocation2 + $0x8] sm:$0xf] %v1816
    %1881 = vst [vmem:[#allocation2 + $0xc] sm:$0xf] %v1817
    %1882 = vst [vmem:[#allocation2 + $0x10] sm:$0xf] %v1818
    %1883 = vst [vmem:[#allocation2 + $0x14] sm:$0xf] %v1819
    %1884 = vst [vmem:[#allocation2 + $0x18] sm:$0xf] %v1820
    %1885 = vst [vmem:[#allocation2 + $0x1c] sm:$0xf] %v1821
    %1886 = vst [vmem:[#allocation2 + $0x20] sm:$0xf] %v1822
    %1887 = vst [vmem:[#allocation2 + $0x24] sm:$0xf] %v1823
    %1888 = vst [vmem:[#allocation2 + $0x28] sm:$0xf] %v1824
    %1889 = vst [vmem:[#allocation2 + $0x2c] sm:$0xf] %v1825
    %1890 = vst [vmem:[#allocation2 + $0x30] sm:$0xf] %v1826
    %1891 = vst [vmem:[#allocation2 + $0x34] sm:$0xf] %v1827
    %1892 = vst [vmem:[#allocation2 + $0x38] sm:$0xf] %v1828
    %1893 = vst [vmem:[#allocation2 + $0x3c] sm:$0xf] %v1829
    %1894 = vst [vmem:[#allocation2 + $0x40] sm:$0xf] %v1830
    %1895 = vst [vmem:[#allocation2 + $0x44] sm:$0xf] %v1831
    %1896 = vst [vmem:[#allocation2 + $0x48] sm:$0xf] %v1832
    %1897 = vst [vmem:[#allocation2 + $0x4c] sm:$0xf] %v1833
    %1898 = vst [vmem:[#allocation2 + $0x50] sm:$0xf] %v1834
    %1899 = vst [vmem:[#allocation2 + $0x54] sm:$0xf] %v1835
    %1900 = vst [vmem:[#allocation2 + $0x58] sm:$0xf] %v1836
    %1901 = vst [vmem:[#allocation2 + $0x5c] sm:$0xf] %v1837
    %1902 = vst [vmem:[#allocation2 + $0x60] sm:$0xf] %v1838
    %1903 = vst [vmem:[#allocation2 + $0x64] sm:$0xf] %v1839
    %1904 = vst [vmem:[#allocation2 + $0x68] sm:$0xf] %v1840
    %1905 = vst [vmem:[#allocation2 + $0x6c] sm:$0xf] %v1841
    %1906 = vst [vmem:[#allocation2 + $0x70] sm:$0xf] %v1842
    %1907 = vst [vmem:[#allocation2 + $0x74] sm:$0xf] %v1843
    %1908 = vst [vmem:[#allocation2 + $0x78] sm:$0xf] %v1844
    %1909 = vst [vmem:[#allocation2 + $0x7c] sm:$0xf] %v1845
    %1910 = vst [vmem:[#allocation2 + $0x80] sm:$0xf] %v1846
    %1911 = vst [vmem:[#allocation2 + $0x84] sm:$0xf] %v1847
    %1912 = vst [vmem:[#allocation2 + $0x88] sm:$0xf] %v1848
    %1913 = vst [vmem:[#allocation2 + $0x8c] sm:$0xf] %v1849
    %1914 = vst [vmem:[#allocation2 + $0x90] sm:$0xf] %v1850
    %1915 = vst [vmem:[#allocation2 + $0x94] sm:$0xf] %v1851
    %1916 = vst [vmem:[#allocation2 + $0x98] sm:$0xf] %v1852
    %1917 = vst [vmem:[#allocation2 + $0x9c] sm:$0xf] %v1853
    %1918 = vst [vmem:[#allocation2 + $0xa0] sm:$0xf] %v1854
    %1919 = vst [vmem:[#allocation2 + $0xa4] sm:$0xf] %v1855
    %1920 = vst [vmem:[#allocation2 + $0xa8] sm:$0xf] %v1856
    %1921 = vst [vmem:[#allocation2 + $0xac] sm:$0xf] %v1857
    %1922 = vst [vmem:[#allocation2 + $0xb0] sm:$0xf] %v1858
    %1923 = vst [vmem:[#allocation2 + $0xb4] sm:$0xf] %v1859
    %1924 = vst [vmem:[#allocation2 + $0xb8] sm:$0xf] %v1860
    %1925 = vst [vmem:[#allocation2 + $0xbc] sm:$0xf] %v1861
    %1926 = vst [vmem:[#allocation2 + $0xc0] sm:$0xf] %v1862
    %1927 = vst [vmem:[#allocation2 + $0xc4] sm:$0xf] %v1863
    %1928 = vst [vmem:[#allocation2 + $0xc8] sm:$0xf] %v1864
    %1929 = vst [vmem:[#allocation2 + $0xcc] sm:$0xf] %v1865
    %1930 = vst [vmem:[#allocation2 + $0xd0] sm:$0xf] %v1866
    %1931 = vst [vmem:[#allocation2 + $0xd4] sm:$0xf] %v1867
    %1932 = vst [vmem:[#allocation2 + $0xd8] sm:$0xf] %v1868
    %1933 = vst [vmem:[#allocation2 + $0xdc] sm:$0xf] %v1869
    %1934 = vst [vmem:[#allocation2 + $0xe0] sm:$0xf] %v1870
    %1935 = vst [vmem:[#allocation2 + $0xe4] sm:$0xf] %v1871
    %1936 = vst [vmem:[#allocation2 + $0xe8] sm:$0xf] %v1872
    %1937 = vst [vmem:[#allocation2 + $0xec] sm:$0xf] %v1873
    %1938 = vst [vmem:[#allocation2 + $0xf0] sm:$0xf] %v1874
    %1939 = vst [vmem:[#allocation2 + $0xf4] sm:$0xf] %v1875
    %1940 = vst [vmem:[#allocation2 + $0xf8] sm:$0xf] %v1876
    %1941 = vst [vmem:[#allocation2 + $0xfc] sm:$0xf] %v1877
    // Predicated region
    $region14: #{tpu_custom_call.1} parent=1 // pred_check
      _
    $region15: #{tpu_custom_call.1} parent=1 // pred_check_branch
      %1943 = sbr.rel (0) target = $region17
    $region16: #{tpu_custom_call.1} parent=1 // pred_region
      %1945 = vsyncadd [#allocation3], 0
      %s1946 = sshll.u32 [#allocation2], 4
      %s1947 = int_to_ptr.vmem [resolvable:$true] %s1946
      %s1948 = sshll.u32 %s3, 4
      %s1949 = int_to_ptr.hbm [resolvable:$true] %s1948
      %1954 = dma.vmem_to_hbm [thread:$0]  %s1947, 4096, %s1949, [#allocation3], 64, 64, 4
    $region17: #{tpu_custom_call.1} parent=1 // pred_fallthru
      _
    // Predicated region
    $region18: #{tpu_custom_call.1} parent=1 // pred_check
      _
    $region19: #{tpu_custom_call.1} parent=1 // pred_check_branch
      %1956 = sbr.rel (0) target = $region21
    $region20: #{tpu_custom_call.1} parent=1 // pred_region
      %1958 = dma.done [#allocation3], 4096
    $region21: #{tpu_custom_call.1} parent=1 // pred_fallthru
      _
    %1959 = vsyncpa [#allocation3], 1

</llo_original>
